<compile_context>
chip_gen: v7x
topology: tpu7x:2x2x1
jax: 0.10.0
libtpu: 0.0.40
codegen_flags: <defaults>
</compile_context>

<pallas_src>
import functools

import jax
import jax.numpy as jnp
from jax import lax
from jax.experimental import pallas as pl
from jax.experimental.pallas import tpu as pltpu


_MAX_TIME_CHUNK = 128        # time steps per grid step (after projection hoist)
_FULL_UNROLL_MAX_STEPS = 8   # <= this: static unroll; else fori_loop(unroll=8)
_FORI_UNROLL = 8


def _round_up(n, m):
    return ((n + m - 1) // m) * m


def _pick_time_chunk(seq_len, max_chunk=_MAX_TIME_CHUNK):
    """Chunk length: whole sequence if small, else a multiple-of-8 divisor."""
    if seq_len <= max_chunk:
        return seq_len
    best = None
    for tc in range(8, max_chunk + 1, 8):
        if seq_len % tc == 0:
            best = tc
    if best is not None:
        return best
    # TODO(synk): ragged tail — falls back to a single chunk; for very long T
    # with no multiple-of-8 divisor, add a padded tail masked with pl.when.
    return seq_len


def _lstm_encoder_kernel(x_ref, wih_t_ref, whh_t_ref, b_ref, out_ref,
                         h_sc, c_sc, gx_sc):
    """One grid step == one chunk of tc LSTM time steps (serial recurrence).

    x_ref    : (tc, Bp, D_in)   time-major input chunk
    wih_t_ref: (D_in, 4Hp)      W_ih^T  (resident; matmul dtype)
    whh_t_ref: (Hp, 4Hp)        W_hh^T  (resident; matmul dtype)
    b_ref    : (1, 4Hp)         b_ih + b_hh  (f32)
    out_ref  : (Bp, Hp)         final hidden state h_T (constant output block)
    h_sc/c_sc: (Bp, Hp) f32     recurrent state carried across chunks
    gx_sc    : (tc, Bp, 4Hp) f32  hoisted input projection for this chunk
    """
    c_idx = pl.program_id(0)

    @pl.when(c_idx == 0)
    def _init():
        h_sc[...] = jnp.zeros_like(h_sc)
        c_sc[...] = jnp.zeros_like(c_sc)

    tc, bsz, d_in = x_ref.shape
    _, hp = h_sc.shape
    mm_dtype = whh_t_ref.dtype

    # ---- Hoisted input projection: one chunk-sized MXU matmul + one bias add
    # (removes tc tiny matmuls and tc bias adds from the serial critical path).
    x_flat = x_ref[...].reshape(tc * bsz, d_in).astype(mm_dtype)
    gx = jnp.dot(x_flat, wih_t_ref[...], preferred_element_type=jnp.float32)
    gx = gx + jnp.broadcast_to(b_ref[...], gx.shape)      # hoisted, once/chunk
    gx_sc[...] = gx.reshape(tc, bsz, 4 * hp)

    whh = whh_t_ref[...]                                   # resident recurrent W

    def one_step(h, c, gate_x):
        # Only the (Bp,Hp)@(Hp,4Hp) recurrent matmul remains on the chain.
        gates = jnp.dot(h.astype(mm_dtype), whh,
                        preferred_element_type=jnp.float32) + gate_x
        # PyTorch gate order (i, f, g, o); Hp is a multiple of 128 so every
        # gate slice below is lane-aligned. Elementwise math stays f32
        # (v5e has no bf16 VPU/EUP; accumulation/carry stay f32 everywhere).
        i_g = jax.nn.sigmoid(gates[:, 0:hp])
        f_g = jax.nn.sigmoid(gates[:, hp:2 * hp])
        g_g = jnp.tanh(gates[:, 2 * hp:3 * hp])
        o_g = jax.nn.sigmoid(gates[:, 3 * hp:4 * hp])
        c_new = f_g * c + i_g * g_g
        h_new = o_g * jnp.tanh(c_new)
        return h_new, c_new

    h = h_sc[...]
    c = c_sc[...]

    if tc <= _FULL_UNROLL_MAX_STEPS:
        # Small chunk: full static unroll, per-step gate rows read from the
        # VMEM scratch ref with static first-axis indices (no long live ranges).
        for t in range(tc):
            h, c = one_step(h, c, gx_sc[t])
    else:
        # Bounded unroll: keeps LLO scheduling visibility while bounding vreg
        # live ranges; gate rows read per-step from the scratch ref.
        def body(t, carry):
            h_t, c_t = carry
            return one_step(h_t, c_t, gx_sc[t])

        h, c = lax.fori_loop(0, tc, body, (h, c),
                             unroll=min(_FORI_UNROLL, tc))

    h_sc[...] = h
    c_sc[...] = c

    # Constant output block stays resident in VMEM; only write it on the final
    # chunk (single HBM writeback at the end of the grid).
    @pl.when(c_idx == pl.num_programs(0) - 1)
    def _write_out():
        out_ref[...] = h.astype(out_ref.dtype)


@functools.partial(jax.jit, static_argnames=("matmul_dtype",))
def lstm_encoder_forward(x, w_ih, w_hh, b_ih, b_hh, *,
                         matmul_dtype=jnp.float32):
    """x: (B, T, D_in) batch-first. Returns h_end[-1]: (B, H) in float32.

    matmul_dtype=jnp.bfloat16 casts ONLY the MXU operands (weights, x, h-as-
    input) to bf16; accumulation, bias, gate math and the h/c carry stay f32.
    """
    B, T, D_in = x.shape
    H = w_hh.shape[1]
    Bp = _round_up(B, 8)      # sublane multiple for the recurrent state
    Hp = _round_up(H, 128)    # lane multiple so gate slices are lane-aligned

    # ---- parameter prep: per-gate zero-padding of H -> Hp keeps the PyTorch
    # (i, f, g, o) gate layout and makes the padded lanes provably inert
    # (padded gates get 0 pre-activation -> f=0.5, g=0 -> c,h stay exactly 0).
    def pad_gate_rows(w):                       # (4H, X) -> (4Hp, X)
        w = w.reshape(4, H, -1)
        w = jnp.pad(w, ((0, 0), (0, Hp - H), (0, 0)))
        return w.reshape(4 * Hp, -1)

    w_ih_p = pad_gate_rows(w_ih.astype(jnp.float32))            # (4Hp, D_in)
    w_hh_p = pad_gate_rows(w_hh.astype(jnp.float32))            # (4Hp, H)
    w_hh_p = jnp.pad(w_hh_p, ((0, 0), (0, Hp - H)))             # (4Hp, Hp)
    bias_p = pad_gate_rows(
        (b_ih + b_hh).astype(jnp.float32)[:, None]).reshape(1, 4 * Hp)

    wih_t = jnp.transpose(w_ih_p).astype(matmul_dtype)          # (D_in, 4Hp)
    whh_t = jnp.transpose(w_hh_p).astype(matmul_dtype)          # (Hp, 4Hp)

    # ---- input prep: time-major + batch padded to a sublane multiple, so the
    # in-kernel leading-dim merge and per-step gx_sc[t] reads are relabels.
    x_tm = jnp.transpose(x, (1, 0, 2)).astype(jnp.float32)      # (T, B, D_in)
    x_tm = jnp.pad(x_tm, ((0, 0), (0, Bp - B), (0, 0)))         # (T, Bp, D_in)

    tc = _pick_time_chunk(T)
    num_chunks = T // tc

    grid_spec = pltpu.PrefetchScalarGridSpec(
        num_scalar_prefetch=0,
        grid=(num_chunks,),
        in_specs=[
            pl.BlockSpec((tc, Bp, D_in), lambda c: (c, 0, 0)),   # x chunk
            pl.BlockSpec((D_in, 4 * Hp), lambda c: (0, 0)),      # W_ih^T (resident)
            pl.BlockSpec((Hp, 4 * Hp), lambda c: (0, 0)),        # W_hh^T (resident)
            pl.BlockSpec((1, 4 * Hp), lambda c: (0, 0)),         # bias (resident)
        ],
        out_specs=pl.BlockSpec((Bp, Hp), lambda c: (0, 0)),      # h_end[-1]
        scratch_shapes=[
            pltpu.VMEM((Bp, Hp), jnp.float32),          # h carry
            pltpu.VMEM((Bp, Hp), jnp.float32),          # c carry
            pltpu.VMEM((tc, Bp, 4 * Hp), jnp.float32),  # hoisted input projection
        ],
    )

    out_p = pl.pallas_call(
        _lstm_encoder_kernel,
        out_shape=jax.ShapeDtypeStruct((Bp, Hp), jnp.float32),
        grid_spec=grid_spec,
        compiler_params=pltpu.CompilerParams(
            dimension_semantics=("arbitrary",),      # time recurrence is serial
            vmem_limit_bytes=64 * 1024 * 1024,       # safe on v5e/v6e/v7x
        ),
    )(x_tm, wih_t, whh_t, bias_p)

    return out_p[:B, :H]


def _lstm_encoder_reference(x, w_ih, w_hh, b_ih, b_hh):
    """Pure-JAX reference matching torch.nn.LSTM + h_end[-1]."""
    B, T, D_in = x.shape
    H = w_hh.shape[1]
    x_tm = jnp.transpose(x, (1, 0, 2))   # (T, B, D_in)

    def step(carry, x_t):
        h, c = carry
        gates = x_t @ w_ih.T + b_ih + h @ w_hh.T + b_hh
        i, f, g, o = jnp.split(gates, 4, axis=1)
        i = jax.nn.sigmoid(i)
        f = jax.nn.sigmoid(f)
        g = jnp.tanh(g)
        o = jax.nn.sigmoid(o)
        c = f * c + i * g
        h = o * jnp.tanh(c)
        return (h, c), None

    init = (jnp.zeros((B, H), jnp.float32), jnp.zeros((B, H), jnp.float32))
    (h_end, _), _ = lax.scan(step, init, x_tm)
    return h_end


def _make_inputs(key, batch, seq_len, input_dim, hidden_dim):
    k_x, k_wih, k_whh, k_bih, k_bhh = jax.random.split(key, 5)
    bound = 1.0 / (hidden_dim ** 0.5)
    x = jax.random.normal(k_x, (batch, seq_len, input_dim), jnp.float32)
    w_ih = jax.random.uniform(k_wih, (4 * hidden_dim, input_dim),
                              jnp.float32, -bound, bound)
    w_hh = jax.random.uniform(k_whh, (4 * hidden_dim, hidden_dim),
                              jnp.float32, -bound, bound)
    b_ih = jax.random.uniform(k_bih, (4 * hidden_dim,), jnp.float32, -bound, bound)
    b_hh = jax.random.uniform(k_bhh, (4 * hidden_dim,), jnp.float32, -bound, bound)
    return x, w_ih, w_hh, b_ih, b_hh


if __name__ == "__main__":
    key = jax.random.PRNGKey(0)
    k1, k2 = jax.random.split(key)

    # --- Test 1: small shapes consistent with the module (exercises H/B
    # padding and the fully-unrolled static time loop). ---
    B1, T1, D1, H1 = 4, 8, 8, 32
    args1 = _make_inputs(k1, B1, T1, D1, H1)
    out1 = jax.block_until_ready(lstm_encoder_forward(*args1))
    ref1 = _lstm_encoder_reference(*args1)
    assert out1.shape == (B1, H1), out1.shape
    assert jnp.allclose(out1, ref1, atol=1e-4, rtol=1e-4), "f32 small mismatch"

    # --- Test 2: larger, lane/sublane-aligned shapes (exercises multi-chunk
    # grid, the hoisted chunk projection, and the fori_loop(unroll=8) path). ---
    B2, T2, D2, H2 = 8, 256, 16, 128
    args2 = _make_inputs(k2, B2, T2, D2, H2)
    out2 = jax.block_until_ready(lstm_encoder_forward(*args2))
    ref2 = _lstm_encoder_reference(*args2)
    assert out2.shape == (B2, H2), out2.shape
    assert jnp.allclose(out2, ref2, atol=1e-4, rtol=1e-4), "f32 large mismatch"

    # --- Test 3: bf16 MXU operands, f32 accumulation/carry (deliberate
    # numerics change vs torch f32; loose tolerance). ---
    out3 = jax.block_until_ready(
        lstm_encoder_forward(*args2, matmul_dtype=jnp.bfloat16))
    assert jnp.all(jnp.isfinite(out3))
    assert jnp.allclose(out3, ref2, atol=1e-1, rtol=1e-1), "bf16 mismatch"

    print("KERNEL_OK")
</pallas_src>

<mosaic_0001>
module attributes {stable_mosaic.version = 11 : i64} {
  func.func @_lstm_encoder_kernel(%arg0: i32, %arg1: memref<8x8x8xf32, #tpu.memory_space<vmem>>, %arg2: memref<8x512xf32, #tpu.memory_space<vmem>>, %arg3: memref<128x512xf32, #tpu.memory_space<vmem>>, %arg4: memref<1x512xf32, #tpu.memory_space<vmem>>, %arg5: memref<8x128xf32, #tpu.memory_space<vmem>>, %arg6: memref<8x128xf32, #tpu.memory_space<vmem>>, %arg7: memref<8x128xf32, #tpu.memory_space<vmem>>, %arg8: memref<8x8x512xf32, #tpu.memory_space<vmem>>) attributes {dimension_semantics = [#tpu.dimension_semantics<arbitrary>], iteration_bounds = array<i64: 1>, scalar_prefetch = 0 : i64, scratch_operands = 3 : i64, tpu.core_type = #tpu.core_type<tc>, window_params = [{transform_indices = @transform_0, window_bounds = array<i64: 8, 8, 8>}, {pipeline_mode = #tpu.pipeline_mode<synchronous>, transform_indices = @transform_1, window_bounds = array<i64: 8, 512>}, {pipeline_mode = #tpu.pipeline_mode<synchronous>, transform_indices = @transform_2, window_bounds = array<i64: 128, 512>}, {pipeline_mode = #tpu.pipeline_mode<synchronous>, transform_indices = @transform_3, window_bounds = array<i64: 1, 512>}, {pipeline_mode = #tpu.pipeline_mode<synchronous>, transform_indices = @transform_4, window_bounds = array<i64: 8, 128>}]} {
    %c0_i32 = arith.constant 0 : i32
    %0 = arith.cmpi eq, %arg0, %c0_i32 : i32
    %1 = arith.extui %0 : i1 to i32
    %c0_i32_0 = arith.constant 0 : i32
    %2 = arith.cmpi ne, %1, %c0_i32_0 : i32
    scf.if %2 {
      %cst_71 = arith.constant 0.000000e+00 : f32
      %253 = vector.broadcast %cst_71 : f32 to vector<8x128xf32>
      %c0_72 = arith.constant 0 : index
      %c0_73 = arith.constant 0 : index
      %254 = vector.load %arg6[%c0_72, %c0_73] : memref<8x128xf32, #tpu.memory_space<vmem>>, vector<8x128xf32>
      tpu.vector_store %arg6[%c0_72, %c0_73], %253 {strides = array<i32>} : memref<8x128xf32, #tpu.memory_space<vmem>>, vector<8x128xf32>,
      %cst_74 = arith.constant 0.000000e+00 : f32
      %255 = vector.broadcast %cst_74 : f32 to vector<8x128xf32>
      %c0_75 = arith.constant 0 : index
      %c0_76 = arith.constant 0 : index
      %256 = vector.load %arg7[%c0_75, %c0_76] : memref<8x128xf32, #tpu.memory_space<vmem>>, vector<8x128xf32>
      tpu.vector_store %arg7[%c0_75, %c0_76], %255 {strides = array<i32>} : memref<8x128xf32, #tpu.memory_space<vmem>>, vector<8x128xf32>,
    } else {
    }
    %c0 = arith.constant 0 : index
    %c0_1 = arith.constant 0 : index
    %c0_2 = arith.constant 0 : index
    %3 = vector.load %arg1[%c0, %c0_1, %c0_2] : memref<8x8x8xf32, #tpu.memory_space<vmem>>, vector<8x8x8xf32>
    %4 = vector.shape_cast %3 : vector<8x8x8xf32> to vector<64x8xf32>
    %c0_3 = arith.constant 0 : index
    %c0_4 = arith.constant 0 : index
    %5 = vector.load %arg2[%c0_3, %c0_4] : memref<8x512xf32, #tpu.memory_space<vmem>>, vector<8x512xf32>
    %cst = arith.constant dense<0.000000e+00> : vector<64x512xf32>
    %6 = tpu.matmul %4, %5, %cst {dimension_numbers = #tpu.dot_dimension_numbers<[1], [0], [0], [1], [0, 0, 1, 1], [], []>} : vector<64x8xf32>, vector<8x512xf32>, vector<64x512xf32> -> vector<64x512xf32>
    %c0_5 = arith.constant 0 : index
    %c0_6 = arith.constant 0 : index
    %7 = vector.load %arg4[%c0_5, %c0_6] : memref<1x512xf32, #tpu.memory_space<vmem>>, vector<1x512xf32>
    %8 = vector.shape_cast %7 : vector<1x512xf32> to vector<1x512xf32>
    %9 = vector.broadcast %8 : vector<1x512xf32> to vector<64x512xf32>
    %10 = arith.addf %6, %9 : vector<64x512xf32>
    %11 = vector.shape_cast %10 : vector<64x512xf32> to vector<8x8x512xf32>
    %c0_7 = arith.constant 0 : index
    %c0_8 = arith.constant 0 : index
    %c0_9 = arith.constant 0 : index
    %12 = vector.load %arg8[%c0_7, %c0_8, %c0_9] : memref<8x8x512xf32, #tpu.memory_space<vmem>>, vector<8x8x512xf32>
    tpu.vector_store %arg8[%c0_7, %c0_8, %c0_9], %11 {strides = array<i32>} : memref<8x8x512xf32, #tpu.memory_space<vmem>>, vector<8x8x512xf32>,
    %c0_10 = arith.constant 0 : index
    %c0_11 = arith.constant 0 : index
    %13 = vector.load %arg3[%c0_10, %c0_11] : memref<128x512xf32, #tpu.memory_space<vmem>>, vector<128x512xf32>
    %c0_12 = arith.constant 0 : index
    %c0_13 = arith.constant 0 : index
    %14 = vector.load %arg6[%c0_12, %c0_13] : memref<8x128xf32, #tpu.memory_space<vmem>>, vector<8x128xf32>
    %c0_14 = arith.constant 0 : index
    %c0_15 = arith.constant 0 : index
    %15 = vector.load %arg7[%c0_14, %c0_15] : memref<8x128xf32, #tpu.memory_space<vmem>>, vector<8x128xf32>
    %c0_16 = arith.constant 0 : index
    %c0_17 = arith.constant 0 : index
    %c0_18 = arith.constant 0 : index
    %16 = vector.load %arg8[%c0_16, %c0_17, %c0_18] : memref<8x8x512xf32, #tpu.memory_space<vmem>>, vector<1x8x512xf32>
    %17 = vector.shape_cast %16 : vector<1x8x512xf32> to vector<8x512xf32>
    %cst_19 = arith.constant dense<0.000000e+00> : vector<8x512xf32>
    %18 = tpu.matmul %14, %13, %cst_19 {dimension_numbers = #tpu.dot_dimension_numbers<[1], [0], [0], [1], [0, 0, 1, 1], [], []>} : vector<8x128xf32>, vector<128x512xf32>, vector<8x512xf32> -> vector<8x512xf32>
    %19 = arith.addf %18, %17 : vector<8x512xf32>
    %20 = vector.extract_strided_slice %19 {offsets = [0, 0], sizes = [8, 128], strides = [1, 1]} : vector<8x512xf32> to vector<8x128xf32>
    %21 = arith.negf %20 : vector<8x128xf32>
    %22 = math.exp %21 : vector<8x128xf32>
    %cst_20 = arith.constant 1.000000e+00 : f32
    %23 = vector.broadcast %cst_20 : f32 to vector<8x128xf32>
    %24 = arith.addf %23, %22 : vector<8x128xf32>
    %25 = arith.divf %23, %24 : vector<8x128xf32>
    %26 = vector.extract_strided_slice %19 {offsets = [0, 128], sizes = [8, 128], strides = [1, 1]} : vector<8x512xf32> to vector<8x128xf32>
    %27 = arith.negf %26 : vector<8x128xf32>
    %28 = math.exp %27 : vector<8x128xf32>
    %cst_21 = arith.constant 1.000000e+00 : f32
    %29 = vector.broadcast %cst_21 : f32 to vector<8x128xf32>
    %30 = arith.addf %29, %28 : vector<8x128xf32>
    %31 = arith.divf %29, %30 : vector<8x128xf32>
    %32 = vector.extract_strided_slice %19 {offsets = [0, 256], sizes = [8, 128], strides = [1, 1]} : vector<8x512xf32> to vector<8x128xf32>
    %33 = math.tanh %32 : vector<8x128xf32>
    %34 = vector.extract_strided_slice %19 {offsets = [0, 384], sizes = [8, 128], strides = [1, 1]} : vector<8x512xf32> to vector<8x128xf32>
    %35 = arith.negf %34 : vector<8x128xf32>
    %36 = math.exp %35 : vector<8x128xf32>
    %cst_22 = arith.constant 1.000000e+00 : f32
    %37 = vector.broadcast %cst_22 : f32 to vector<8x128xf32>
    %38 = arith.addf %37, %36 : vector<8x128xf32>
    %39 = arith.divf %37, %38 : vector<8x128xf32>
    %40 = arith.mulf %31, %15 : vector<8x128xf32>
    %41 = arith.mulf %25, %33 : vector<8x128xf32>
    %42 = arith.addf %40, %41 : vector<8x128xf32>
    %43 = math.tanh %42 : vector<8x128xf32>
    %44 = arith.mulf %39, %43 : vector<8x128xf32>
    %c1 = arith.constant 1 : index
    %c0_23 = arith.constant 0 : index
    %c0_24 = arith.constant 0 : index
    %45 = vector.load %arg8[%c1, %c0_23, %c0_24] : memref<8x8x512xf32, #tpu.memory_space<vmem>>, vector<1x8x512xf32>
    %46 = vector.shape_cast %45 : vector<1x8x512xf32> to vector<8x512xf32>
    %cst_25 = arith.constant dense<0.000000e+00> : vector<8x512xf32>
    %47 = tpu.matmul %44, %13, %cst_25 {dimension_numbers = #tpu.dot_dimension_numbers<[1], [0], [0], [1], [0, 0, 1, 1], [], []>} : vector<8x128xf32>, vector<128x512xf32>, vector<8x512xf32> -> vector<8x512xf32>
    %48 = arith.addf %47, %46 : vector<8x512xf32>
    %49 = vector.extract_strided_slice %48 {offsets = [0, 0], sizes = [8, 128], strides = [1, 1]} : vector<8x512xf32> to vector<8x128xf32>
    %50 = arith.negf %49 : vector<8x128xf32>
    %51 = math.exp %50 : vector<8x128xf32>
    %cst_26 = arith.constant 1.000000e+00 : f32
    %52 = vector.broadcast %cst_26 : f32 to vector<8x128xf32>
    %53 = arith.addf %52, %51 : vector<8x128xf32>
    %54 = arith.divf %52, %53 : vector<8x128xf32>
    %55 = vector.extract_strided_slice %48 {offsets = [0, 128], sizes = [8, 128], strides = [1, 1]} : vector<8x512xf32> to vector<8x128xf32>
    %56 = arith.negf %55 : vector<8x128xf32>
    %57 = math.exp %56 : vector<8x128xf32>
    %cst_27 = arith.constant 1.000000e+00 : f32
    %58 = vector.broadcast %cst_27 : f32 to vector<8x128xf32>
    %59 = arith.addf %58, %57 : vector<8x128xf32>
    %60 = arith.divf %58, %59 : vector<8x128xf32>
    %61 = vector.extract_strided_slice %48 {offsets = [0, 256], sizes = [8, 128], strides = [1, 1]} : vector<8x512xf32> to vector<8x128xf32>
    %62 = math.tanh %61 : vector<8x128xf32>
    %63 = vector.extract_strided_slice %48 {offsets = [0, 384], sizes = [8, 128], strides = [1, 1]} : vector<8x512xf32> to vector<8x128xf32>
    %64 = arith.negf %63 : vector<8x128xf32>
    %65 = math.exp %64 : vector<8x128xf32>
    %cst_28 = arith.constant 1.000000e+00 : f32
    %66 = vector.broadcast %cst_28 : f32 to vector<8x128xf32>
    %67 = arith.addf %66, %65 : vector<8x128xf32>
    %68 = arith.divf %66, %67 : vector<8x128xf32>
    %69 = arith.mulf %60, %42 : vector<8x128xf32>
    %70 = arith.mulf %54, %62 : vector<8x128xf32>
    %71 = arith.addf %69, %70 : vector<8x128xf32>
    %72 = math.tanh %71 : vector<8x128xf32>
    %73 = arith.mulf %68, %72 : vector<8x128xf32>
    %c2 = arith.constant 2 : index
    %c0_29 = arith.constant 0 : index
    %c0_30 = arith.constant 0 : index
    %74 = vector.load %arg8[%c2, %c0_29, %c0_30] : memref<8x8x512xf32, #tpu.memory_space<vmem>>, vector<1x8x512xf32>
    %75 = vector.shape_cast %74 : vector<1x8x512xf32> to vector<8x512xf32>
    %cst_31 = arith.constant dense<0.000000e+00> : vector<8x512xf32>
    %76 = tpu.matmul %73, %13, %cst_31 {dimension_numbers = #tpu.dot_dimension_numbers<[1], [0], [0], [1], [0, 0, 1, 1], [], []>} : vector<8x128xf32>, vector<128x512xf32>, vector<8x512xf32> -> vector<8x512xf32>
    %77 = arith.addf %76, %75 : vector<8x512xf32>
    %78 = vector.extract_strided_slice %77 {offsets = [0, 0], sizes = [8, 128], strides = [1, 1]} : vector<8x512xf32> to vector<8x128xf32>
    %79 = arith.negf %78 : vector<8x128xf32>
    %80 = math.exp %79 : vector<8x128xf32>
    %cst_32 = arith.constant 1.000000e+00 : f32
    %81 = vector.broadcast %cst_32 : f32 to vector<8x128xf32>
    %82 = arith.addf %81, %80 : vector<8x128xf32>
    %83 = arith.divf %81, %82 : vector<8x128xf32>
    %84 = vector.extract_strided_slice %77 {offsets = [0, 128], sizes = [8, 128], strides = [1, 1]} : vector<8x512xf32> to vector<8x128xf32>
    %85 = arith.negf %84 : vector<8x128xf32>
    %86 = math.exp %85 : vector<8x128xf32>
    %cst_33 = arith.constant 1.000000e+00 : f32
    %87 = vector.broadcast %cst_33 : f32 to vector<8x128xf32>
    %88 = arith.addf %87, %86 : vector<8x128xf32>
    %89 = arith.divf %87, %88 : vector<8x128xf32>
    %90 = vector.extract_strided_slice %77 {offsets = [0, 256], sizes = [8, 128], strides = [1, 1]} : vector<8x512xf32> to vector<8x128xf32>
    %91 = math.tanh %90 : vector<8x128xf32>
    %92 = vector.extract_strided_slice %77 {offsets = [0, 384], sizes = [8, 128], strides = [1, 1]} : vector<8x512xf32> to vector<8x128xf32>
    %93 = arith.negf %92 : vector<8x128xf32>
    %94 = math.exp %93 : vector<8x128xf32>
    %cst_34 = arith.constant 1.000000e+00 : f32
    %95 = vector.broadcast %cst_34 : f32 to vector<8x128xf32>
    %96 = arith.addf %95, %94 : vector<8x128xf32>
    %97 = arith.divf %95, %96 : vector<8x128xf32>
    %98 = arith.mulf %89, %71 : vector<8x128xf32>
    %99 = arith.mulf %83, %91 : vector<8x128xf32>
    %100 = arith.addf %98, %99 : vector<8x128xf32>
    %101 = math.tanh %100 : vector<8x128xf32>
    %102 = arith.mulf %97, %101 : vector<8x128xf32>
    %c3 = arith.constant 3 : index
    %c0_35 = arith.constant 0 : index
    %c0_36 = arith.constant 0 : index
    %103 = vector.load %arg8[%c3, %c0_35, %c0_36] : memref<8x8x512xf32, #tpu.memory_space<vmem>>, vector<1x8x512xf32>
    %104 = vector.shape_cast %103 : vector<1x8x512xf32> to vector<8x512xf32>
    %cst_37 = arith.constant dense<0.000000e+00> : vector<8x512xf32>
    %105 = tpu.matmul %102, %13, %cst_37 {dimension_numbers = #tpu.dot_dimension_numbers<[1], [0], [0], [1], [0, 0, 1, 1], [], []>} : vector<8x128xf32>, vector<128x512xf32>, vector<8x512xf32> -> vector<8x512xf32>
    %106 = arith.addf %105, %104 : vector<8x512xf32>
    %107 = vector.extract_strided_slice %106 {offsets = [0, 0], sizes = [8, 128], strides = [1, 1]} : vector<8x512xf32> to vector<8x128xf32>
    %108 = arith.negf %107 : vector<8x128xf32>
    %109 = math.exp %108 : vector<8x128xf32>
    %cst_38 = arith.constant 1.000000e+00 : f32
    %110 = vector.broadcast %cst_38 : f32 to vector<8x128xf32>
    %111 = arith.addf %110, %109 : vector<8x128xf32>
    %112 = arith.divf %110, %111 : vector<8x128xf32>
    %113 = vector.extract_strided_slice %106 {offsets = [0, 128], sizes = [8, 128], strides = [1, 1]} : vector<8x512xf32> to vector<8x128xf32>
    %114 = arith.negf %113 : vector<8x128xf32>
    %115 = math.exp %114 : vector<8x128xf32>
    %cst_39 = arith.constant 1.000000e+00 : f32
    %116 = vector.broadcast %cst_39 : f32 to vector<8x128xf32>
    %117 = arith.addf %116, %115 : vector<8x128xf32>
    %118 = arith.divf %116, %117 : vector<8x128xf32>
    %119 = vector.extract_strided_slice %106 {offsets = [0, 256], sizes = [8, 128], strides = [1, 1]} : vector<8x512xf32> to vector<8x128xf32>
    %120 = math.tanh %119 : vector<8x128xf32>
    %121 = vector.extract_strided_slice %106 {offsets = [0, 384], sizes = [8, 128], strides = [1, 1]} : vector<8x512xf32> to vector<8x128xf32>
    %122 = arith.negf %121 : vector<8x128xf32>
    %123 = math.exp %122 : vector<8x128xf32>
    %cst_40 = arith.constant 1.000000e+00 : f32
    %124 = vector.broadcast %cst_40 : f32 to vector<8x128xf32>
    %125 = arith.addf %124, %123 : vector<8x128xf32>
    %126 = arith.divf %124, %125 : vector<8x128xf32>
    %127 = arith.mulf %118, %100 : vector<8x128xf32>
    %128 = arith.mulf %112, %120 : vector<8x128xf32>
    %129 = arith.addf %127, %128 : vector<8x128xf32>
    %130 = math.tanh %129 : vector<8x128xf32>
    %131 = arith.mulf %126, %130 : vector<8x128xf32>
    %c4 = arith.constant 4 : index
    %c0_41 = arith.constant 0 : index
    %c0_42 = arith.constant 0 : index
    %132 = vector.load %arg8[%c4, %c0_41, %c0_42] : memref<8x8x512xf32, #tpu.memory_space<vmem>>, vector<1x8x512xf32>
    %133 = vector.shape_cast %132 : vector<1x8x512xf32> to vector<8x512xf32>
    %cst_43 = arith.constant dense<0.000000e+00> : vector<8x512xf32>
    %134 = tpu.matmul %131, %13, %cst_43 {dimension_numbers = #tpu.dot_dimension_numbers<[1], [0], [0], [1], [0, 0, 1, 1], [], []>} : vector<8x128xf32>, vector<128x512xf32>, vector<8x512xf32> -> vector<8x512xf32>
    %135 = arith.addf %134, %133 : vector<8x512xf32>
    %136 = vector.extract_strided_slice %135 {offsets = [0, 0], sizes = [8, 128], strides = [1, 1]} : vector<8x512xf32> to vector<8x128xf32>
    %137 = arith.negf %136 : vector<8x128xf32>
    %138 = math.exp %137 : vector<8x128xf32>
    %cst_44 = arith.constant 1.000000e+00 : f32
    %139 = vector.broadcast %cst_44 : f32 to vector<8x128xf32>
    %140 = arith.addf %139, %138 : vector<8x128xf32>
    %141 = arith.divf %139, %140 : vector<8x128xf32>
    %142 = vector.extract_strided_slice %135 {offsets = [0, 128], sizes = [8, 128], strides = [1, 1]} : vector<8x512xf32> to vector<8x128xf32>
    %143 = arith.negf %142 : vector<8x128xf32>
    %144 = math.exp %143 : vector<8x128xf32>
    %cst_45 = arith.constant 1.000000e+00 : f32
    %145 = vector.broadcast %cst_45 : f32 to vector<8x128xf32>
    %146 = arith.addf %145, %144 : vector<8x128xf32>
    %147 = arith.divf %145, %146 : vector<8x128xf32>
    %148 = vector.extract_strided_slice %135 {offsets = [0, 256], sizes = [8, 128], strides = [1, 1]} : vector<8x512xf32> to vector<8x128xf32>
    %149 = math.tanh %148 : vector<8x128xf32>
    %150 = vector.extract_strided_slice %135 {offsets = [0, 384], sizes = [8, 128], strides = [1, 1]} : vector<8x512xf32> to vector<8x128xf32>
    %151 = arith.negf %150 : vector<8x128xf32>
    %152 = math.exp %151 : vector<8x128xf32>
    %cst_46 = arith.constant 1.000000e+00 : f32
    %153 = vector.broadcast %cst_46 : f32 to vector<8x128xf32>
    %154 = arith.addf %153, %152 : vector<8x128xf32>
    %155 = arith.divf %153, %154 : vector<8x128xf32>
    %156 = arith.mulf %147, %129 : vector<8x128xf32>
    %157 = arith.mulf %141, %149 : vector<8x128xf32>
    %158 = arith.addf %156, %157 : vector<8x128xf32>
    %159 = math.tanh %158 : vector<8x128xf32>
    %160 = arith.mulf %155, %159 : vector<8x128xf32>
    %c5 = arith.constant 5 : index
    %c0_47 = arith.constant 0 : index
    %c0_48 = arith.constant 0 : index
    %161 = vector.load %arg8[%c5, %c0_47, %c0_48] : memref<8x8x512xf32, #tpu.memory_space<vmem>>, vector<1x8x512xf32>
    %162 = vector.shape_cast %161 : vector<1x8x512xf32> to vector<8x512xf32>
    %cst_49 = arith.constant dense<0.000000e+00> : vector<8x512xf32>
    %163 = tpu.matmul %160, %13, %cst_49 {dimension_numbers = #tpu.dot_dimension_numbers<[1], [0], [0], [1], [0, 0, 1, 1], [], []>} : vector<8x128xf32>, vector<128x512xf32>, vector<8x512xf32> -> vector<8x512xf32>
    %164 = arith.addf %163, %162 : vector<8x512xf32>
    %165 = vector.extract_strided_slice %164 {offsets = [0, 0], sizes = [8, 128], strides = [1, 1]} : vector<8x512xf32> to vector<8x128xf32>
    %166 = arith.negf %165 : vector<8x128xf32>
    %167 = math.exp %166 : vector<8x128xf32>
    %cst_50 = arith.constant 1.000000e+00 : f32
    %168 = vector.broadcast %cst_50 : f32 to vector<8x128xf32>
    %169 = arith.addf %168, %167 : vector<8x128xf32>
    %170 = arith.divf %168, %169 : vector<8x128xf32>
    %171 = vector.extract_strided_slice %164 {offsets = [0, 128], sizes = [8, 128], strides = [1, 1]} : vector<8x512xf32> to vector<8x128xf32>
    %172 = arith.negf %171 : vector<8x128xf32>
    %173 = math.exp %172 : vector<8x128xf32>
    %cst_51 = arith.constant 1.000000e+00 : f32
    %174 = vector.broadcast %cst_51 : f32 to vector<8x128xf32>
    %175 = arith.addf %174, %173 : vector<8x128xf32>
    %176 = arith.divf %174, %175 : vector<8x128xf32>
    %177 = vector.extract_strided_slice %164 {offsets = [0, 256], sizes = [8, 128], strides = [1, 1]} : vector<8x512xf32> to vector<8x128xf32>
    %178 = math.tanh %177 : vector<8x128xf32>
    %179 = vector.extract_strided_slice %164 {offsets = [0, 384], sizes = [8, 128], strides = [1, 1]} : vector<8x512xf32> to vector<8x128xf32>
    %180 = arith.negf %179 : vector<8x128xf32>
    %181 = math.exp %180 : vector<8x128xf32>
    %cst_52 = arith.constant 1.000000e+00 : f32
    %182 = vector.broadcast %cst_52 : f32 to vector<8x128xf32>
    %183 = arith.addf %182, %181 : vector<8x128xf32>
    %184 = arith.divf %182, %183 : vector<8x128xf32>
    %185 = arith.mulf %176, %158 : vector<8x128xf32>
    %186 = arith.mulf %170, %178 : vector<8x128xf32>
    %187 = arith.addf %185, %186 : vector<8x128xf32>
    %188 = math.tanh %187 : vector<8x128xf32>
    %189 = arith.mulf %184, %188 : vector<8x128xf32>
    %c6 = arith.constant 6 : index
    %c0_53 = arith.constant 0 : index
    %c0_54 = arith.constant 0 : index
    %190 = vector.load %arg8[%c6, %c0_53, %c0_54] : memref<8x8x512xf32, #tpu.memory_space<vmem>>, vector<1x8x512xf32>
    %191 = vector.shape_cast %190 : vector<1x8x512xf32> to vector<8x512xf32>
    %cst_55 = arith.constant dense<0.000000e+00> : vector<8x512xf32>
    %192 = tpu.matmul %189, %13, %cst_55 {dimension_numbers = #tpu.dot_dimension_numbers<[1], [0], [0], [1], [0, 0, 1, 1], [], []>} : vector<8x128xf32>, vector<128x512xf32>, vector<8x512xf32> -> vector<8x512xf32>
    %193 = arith.addf %192, %191 : vector<8x512xf32>
    %194 = vector.extract_strided_slice %193 {offsets = [0, 0], sizes = [8, 128], strides = [1, 1]} : vector<8x512xf32> to vector<8x128xf32>
    %195 = arith.negf %194 : vector<8x128xf32>
    %196 = math.exp %195 : vector<8x128xf32>
    %cst_56 = arith.constant 1.000000e+00 : f32
    %197 = vector.broadcast %cst_56 : f32 to vector<8x128xf32>
    %198 = arith.addf %197, %196 : vector<8x128xf32>
    %199 = arith.divf %197, %198 : vector<8x128xf32>
    %200 = vector.extract_strided_slice %193 {offsets = [0, 128], sizes = [8, 128], strides = [1, 1]} : vector<8x512xf32> to vector<8x128xf32>
    %201 = arith.negf %200 : vector<8x128xf32>
    %202 = math.exp %201 : vector<8x128xf32>
    %cst_57 = arith.constant 1.000000e+00 : f32
    %203 = vector.broadcast %cst_57 : f32 to vector<8x128xf32>
    %204 = arith.addf %203, %202 : vector<8x128xf32>
    %205 = arith.divf %203, %204 : vector<8x128xf32>
    %206 = vector.extract_strided_slice %193 {offsets = [0, 256], sizes = [8, 128], strides = [1, 1]} : vector<8x512xf32> to vector<8x128xf32>
    %207 = math.tanh %206 : vector<8x128xf32>
    %208 = vector.extract_strided_slice %193 {offsets = [0, 384], sizes = [8, 128], strides = [1, 1]} : vector<8x512xf32> to vector<8x128xf32>
    %209 = arith.negf %208 : vector<8x128xf32>
    %210 = math.exp %209 : vector<8x128xf32>
    %cst_58 = arith.constant 1.000000e+00 : f32
    %211 = vector.broadcast %cst_58 : f32 to vector<8x128xf32>
    %212 = arith.addf %211, %210 : vector<8x128xf32>
    %213 = arith.divf %211, %212 : vector<8x128xf32>
    %214 = arith.mulf %205, %187 : vector<8x128xf32>
    %215 = arith.mulf %199, %207 : vector<8x128xf32>
    %216 = arith.addf %214, %215 : vector<8x128xf32>
    %217 = math.tanh %216 : vector<8x128xf32>
    %218 = arith.mulf %213, %217 : vector<8x128xf32>
    %c7 = arith.constant 7 : index
    %c0_59 = arith.constant 0 : index
    %c0_60 = arith.constant 0 : index
    %219 = vector.load %arg8[%c7, %c0_59, %c0_60] : memref<8x8x512xf32, #tpu.memory_space<vmem>>, vector<1x8x512xf32>
    %220 = vector.shape_cast %219 : vector<1x8x512xf32> to vector<8x512xf32>
    %cst_61 = arith.constant dense<0.000000e+00> : vector<8x512xf32>
    %221 = tpu.matmul %218, %13, %cst_61 {dimension_numbers = #tpu.dot_dimension_numbers<[1], [0], [0], [1], [0, 0, 1, 1], [], []>} : vector<8x128xf32>, vector<128x512xf32>, vector<8x512xf32> -> vector<8x512xf32>
    %222 = arith.addf %221, %220 : vector<8x512xf32>
    %223 = vector.extract_strided_slice %222 {offsets = [0, 0], sizes = [8, 128], strides = [1, 1]} : vector<8x512xf32> to vector<8x128xf32>
    %224 = arith.negf %223 : vector<8x128xf32>
    %225 = math.exp %224 : vector<8x128xf32>
    %cst_62 = arith.constant 1.000000e+00 : f32
    %226 = vector.broadcast %cst_62 : f32 to vector<8x128xf32>
    %227 = arith.addf %226, %225 : vector<8x128xf32>
    %228 = arith.divf %226, %227 : vector<8x128xf32>
    %229 = vector.extract_strided_slice %222 {offsets = [0, 128], sizes = [8, 128], strides = [1, 1]} : vector<8x512xf32> to vector<8x128xf32>
    %230 = arith.negf %229 : vector<8x128xf32>
    %231 = math.exp %230 : vector<8x128xf32>
    %cst_63 = arith.constant 1.000000e+00 : f32
    %232 = vector.broadcast %cst_63 : f32 to vector<8x128xf32>
    %233 = arith.addf %232, %231 : vector<8x128xf32>
    %234 = arith.divf %232, %233 : vector<8x128xf32>
    %235 = vector.extract_strided_slice %222 {offsets = [0, 256], sizes = [8, 128], strides = [1, 1]} : vector<8x512xf32> to vector<8x128xf32>
    %236 = math.tanh %235 : vector<8x128xf32>
    %237 = vector.extract_strided_slice %222 {offsets = [0, 384], sizes = [8, 128], strides = [1, 1]} : vector<8x512xf32> to vector<8x128xf32>
    %238 = arith.negf %237 : vector<8x128xf32>
    %239 = math.exp %238 : vector<8x128xf32>
    %cst_64 = arith.constant 1.000000e+00 : f32
    %240 = vector.broadcast %cst_64 : f32 to vector<8x128xf32>
    %241 = arith.addf %240, %239 : vector<8x128xf32>
    %242 = arith.divf %240, %241 : vector<8x128xf32>
    %243 = arith.mulf %234, %216 : vector<8x128xf32>
    %244 = arith.mulf %228, %236 : vector<8x128xf32>
    %245 = arith.addf %243, %244 : vector<8x128xf32>
    %246 = math.tanh %245 : vector<8x128xf32>
    %247 = arith.mulf %242, %246 : vector<8x128xf32>
    %c0_65 = arith.constant 0 : index
    %c0_66 = arith.constant 0 : index
    %248 = vector.load %arg6[%c0_65, %c0_66] : memref<8x128xf32, #tpu.memory_space<vmem>>, vector<8x128xf32>
    tpu.vector_store %arg6[%c0_65, %c0_66], %247 {strides = array<i32>} : memref<8x128xf32, #tpu.memory_space<vmem>>, vector<8x128xf32>,
    %c0_67 = arith.constant 0 : index
    %c0_68 = arith.constant 0 : index
    %249 = vector.load %arg7[%c0_67, %c0_68] : memref<8x128xf32, #tpu.memory_space<vmem>>, vector<8x128xf32>
    tpu.vector_store %arg7[%c0_67, %c0_68], %245 {strides = array<i32>} : memref<8x128xf32, #tpu.memory_space<vmem>>, vector<8x128xf32>,
    %c0_i32_69 = arith.constant 0 : i32
    %250 = arith.cmpi eq, %arg0, %c0_i32_69 : i32
    %251 = arith.extui %250 : i1 to i32
    %c0_i32_70 = arith.constant 0 : i32
    %252 = arith.cmpi ne, %251, %c0_i32_70 : i32
    scf.if %252 {
      %c0_71 = arith.constant 0 : index
      %c0_72 = arith.constant 0 : index
      %253 = vector.load %arg5[%c0_71, %c0_72] : memref<8x128xf32, #tpu.memory_space<vmem>>, vector<8x128xf32>
      tpu.vector_store %arg5[%c0_71, %c0_72], %247 {strides = array<i32>} : memref<8x128xf32, #tpu.memory_space<vmem>>, vector<8x128xf32>,
    } else {
    }
    return
  }
  func.func @transform_0(%arg0: i32) -> (i32, i32, i32) {
    %c0_i32 = arith.constant 0 : i32
    %c0_i32_0 = arith.constant 0 : i32
    %c0_i32_1 = arith.constant 0 : i32
    return %arg0, %c0_i32, %c0_i32_0 : i32, i32, i32
  }
  func.func @transform_1(%arg0: i32) -> (i32, i32) {
    %c0_i32 = arith.constant 0 : i32
    %c0_i32_0 = arith.constant 0 : i32
    %c0_i32_1 = arith.constant 0 : i32
    return %c0_i32, %c0_i32_0 : i32, i32
  }
  func.func @transform_2(%arg0: i32) -> (i32, i32) {
    %c0_i32 = arith.constant 0 : i32
    %c0_i32_0 = arith.constant 0 : i32
    %c0_i32_1 = arith.constant 0 : i32
    return %c0_i32, %c0_i32_0 : i32, i32
  }
  func.func @transform_3(%arg0: i32) -> (i32, i32) {
    %c0_i32 = arith.constant 0 : i32
    %c0_i32_0 = arith.constant 0 : i32
    %c0_i32_1 = arith.constant 0 : i32
    return %c0_i32, %c0_i32_0 : i32, i32
  }
  func.func @transform_4(%arg0: i32) -> (i32, i32) {
    %c0_i32 = arith.constant 0 : i32
    %c0_i32_0 = arith.constant 0 : i32
    %c0_i32_1 = arith.constant 0 : i32
    return %c0_i32, %c0_i32_0 : i32, i32
  }
}

</mosaic_0001>

<llo_original>
// kernel: lstm_encoder_forward.1
$region0: #{lstm_encoder_forward.1}
  #allocation0 [shape = 'u32[]', space=smem, size = 0x4, offset = 0x4, fixed_abs, tag = 'smem constant byte address 0x4 - core index']
  #allocation1 [shape = 'u32[144,128]{1,0:T(1,128)}', space=vmem, size = 0x12000, scoped, tag = 'internal scratch']
  #allocation2 [shape = 'f32[8,128]{1,0:T(8,128)}', space=vmem, size = 0x1000, scoped, tag = 'scratch operand']
  #allocation3 [shape = 'f32[8,128]{1,0:T(8,128)}', space=vmem, size = 0x1000, scoped, tag = 'scratch operand']
  #allocation4 [shape = 'f32[8,8,512]{2,1,0:T(8,128)}', space=vmem, size = 0x20000, scoped, tag = 'scratch operand']
  %s0 = inlined_call_operand.hbm [shape: f32[8,8,8], index: 0, kind: input, shape index: {}]
  %s1 = inlined_call_operand.hbm [shape: f32[8,512], index: 1, kind: input, shape index: {}]
  %s2 = inlined_call_operand.hbm [shape: f32[128,512], index: 2, kind: input, shape index: {}]
  %s3 = inlined_call_operand.hbm [shape: f32[1,512], index: 3, kind: input, shape index: {}]
  %s4 = inlined_call_operand.hbm [shape: f32[8,128], index: 4, kind: output, shape index: {}]
  %s5 = sld [smem:[#allocation0]]
  $region50: #{lstm_encoder_forward.1} parent=0
    _
  %s7 = ssub.s32 1, %s5
  %s8 = scalar_select 0, %s7, %s5
  $region1: #{lstm_encoder_forward.1} parent=0
    #allocation5 [shape = 'u8[32768]{0}', space=vmem, size = 0x8000, scoped, tag = 'input window, operand 0, single buffered']
    #allocation6 [shape = 's32[1]{0}', space=sflag, size = 0x4, scoped, tag = 'scoped memory for lstm_encoder_forward.1']
    #allocation7 [shape = 's32[1]{0}', space=sflag, size = 0x4, scoped, tag = 'scoped memory for lstm_encoder_forward.1']
    #allocation8 [shape = 'u8[16384]{0}', space=vmem, size = 0x4000, scoped, tag = 'input window, operand 1, single buffered']
    #allocation9 [shape = 's32[1]{0}', space=sflag, size = 0x4, scoped, tag = 'scoped memory for lstm_encoder_forward.1']
    #allocation10 [shape = 'u8[262144]{0}', space=vmem, size = 0x40000, scoped, tag = 'input window, operand 2, single buffered']
    #allocation11 [shape = 'u8[2048]{0}', space=vmem, size = 0x800, scoped, tag = 'input window, operand 3, single buffered']
    #allocation12 [shape = 's32[1]{0}', space=sflag, size = 0x4, scoped, tag = 'scoped memory for lstm_encoder_forward.1']
    #allocation13 [shape = 'u8[4096]{0}', space=vmem, size = 0x1000, scoped, tag = 'output window, operand 0, single buffered']
    %9 = vsyncpa [#allocation6], 0
    %10 = vsyncpa [#allocation9], 0
    %11 = vsyncpa [#allocation12], 0
    %12 = vsyncpa [#allocation7], 0
    // Predicated region
    $region2: #{lstm_encoder_forward.1} parent=1 // pred_check
      _
    $region3: #{lstm_encoder_forward.1} parent=1 // pred_check_branch
      %14 = sbr.rel (0) target = $region5
    $region4: #{lstm_encoder_forward.1} parent=1 // pred_region
      %s16 = ssub.s32 1024, 1024
      %17 = vsyncadd [#allocation6], %s16
      %s18 = sshll.u32 [#allocation5], 4
      %s19 = int_to_ptr.vmem [resolvable:$true] %s18
      %24 = dma.hbm_to_vmem [thread:$0]  %s0, 1024, %s19, [#allocation6], 128, 128, 8
    $region5: #{lstm_encoder_forward.1} parent=1 // pred_fallthru
      _
    // Predicated region
    $region6: #{lstm_encoder_forward.1} parent=1 // pred_check
      _
    $region7: #{lstm_encoder_forward.1} parent=1 // pred_check_branch
      %26 = sbr.rel (0) target = $region9
    $region8: #{lstm_encoder_forward.1} parent=1 // pred_region
      %s28 = ssub.s32 512, 512
      %29 = vsyncadd [#allocation9], %s28
      %s31 = sshll.u32 [#allocation8], 4
      %s32 = int_to_ptr.vmem [resolvable:$true] %s31
      %34 = dma.hbm_to_vmem [thread:$0]  %s1, 512, %s32, [#allocation9]
    $region9: #{lstm_encoder_forward.1} parent=1 // pred_fallthru
      _
    // Predicated region
    $region10: #{lstm_encoder_forward.1} parent=1 // pred_check
      _
    $region11: #{lstm_encoder_forward.1} parent=1 // pred_check_branch
      %36 = sbr.rel (0) target = $region13
    $region12: #{lstm_encoder_forward.1} parent=1 // pred_region
      %s38 = ssub.s32 8192, 8192
      %39 = vsyncadd [#allocation9], %s38
      %s40 = sshll.u32 [#allocation10], 4
      %s41 = int_to_ptr.vmem [resolvable:$true] %s40
      %46 = dma.hbm_to_vmem [thread:$0]  %s2, 8192, %s41, [#allocation9], 512, 512, 32
    $region13: #{lstm_encoder_forward.1} parent=1 // pred_fallthru
      _
    // Predicated region
    $region14: #{lstm_encoder_forward.1} parent=1 // pred_check
      _
    $region15: #{lstm_encoder_forward.1} parent=1 // pred_check_branch
      %48 = sbr.rel (0) target = $region17
    $region16: #{lstm_encoder_forward.1} parent=1 // pred_region
      %s50 = ssub.s32 64, 64
      %51 = vsyncadd [#allocation12], %s50
      %s53 = sshll.u32 [#allocation11], 4
      %s54 = int_to_ptr.vmem [resolvable:$true] %s53
      %56 = dma.hbm_to_vmem [thread:$0]  %s3, 64, %s54, [#allocation12]
    $region17: #{lstm_encoder_forward.1} parent=1 // pred_fallthru
      _
    // Predicated region
    $region18: #{lstm_encoder_forward.1} parent=1 // pred_check
      _
    $region19: #{lstm_encoder_forward.1} parent=1 // pred_check_branch
      %58 = sbr.rel (0) target = $region21
    $region20: #{lstm_encoder_forward.1} parent=1 // pred_region
      %59 = dma.done [#allocation6], 1024
    $region21: #{lstm_encoder_forward.1} parent=1 // pred_fallthru
      _
    // Predicated region
    $region22: #{lstm_encoder_forward.1} parent=1 // pred_check
      _
    $region23: #{lstm_encoder_forward.1} parent=1 // pred_check_branch
      %61 = sbr.rel (0) target = $region25
    $region24: #{lstm_encoder_forward.1} parent=1 // pred_region
      %62 = dma.done [#allocation9], 512
    $region25: #{lstm_encoder_forward.1} parent=1 // pred_fallthru
      _
    // Predicated region
    $region26: #{lstm_encoder_forward.1} parent=1 // pred_check
      _
    $region27: #{lstm_encoder_forward.1} parent=1 // pred_check_branch
      %64 = sbr.rel (0) target = $region29
    $region28: #{lstm_encoder_forward.1} parent=1 // pred_region
      %65 = dma.done [#allocation9], 8192
    $region29: #{lstm_encoder_forward.1} parent=1 // pred_fallthru
      _
    // Predicated region
    $region30: #{lstm_encoder_forward.1} parent=1 // pred_check
      _
    $region31: #{lstm_encoder_forward.1} parent=1 // pred_check_branch
      %67 = sbr.rel (0) target = $region33
    $region32: #{lstm_encoder_forward.1} parent=1 // pred_region
      %68 = dma.done [#allocation12], 64
    $region33: #{lstm_encoder_forward.1} parent=1 // pred_fallthru
      _
    %p69 = scmp.eq.s32.totalorder 0, 0
    // Predicated region
    $region34: #{lstm_encoder_forward.1} parent=1 // pred_check
      %p70 = pneg %p69
    $region35: #{lstm_encoder_forward.1} parent=1 // pred_check_branch
      %72 = sbr.rel (%p70) target = $region37
    $region36: #{lstm_encoder_forward.1} parent=1 // pred_region
      %73 = vst [vmem:[#allocation2] sm:$0xff] 0.0
      %74 = vst [vmem:[#allocation3] sm:$0xff] 0.0
    $region37: #{lstm_encoder_forward.1} parent=1 // pred_fallthru
      _
    %v75 = vld [vmem:[#allocation5] sm:$0xff]
    %v76 = vld [vmem:[#allocation5 + $0x8] sm:$0xff]
    %v77 = vld [vmem:[#allocation5 + $0x10] sm:$0xff]
    %v78 = vld [vmem:[#allocation5 + $0x18] sm:$0xff]
    %v79 = vld [vmem:[#allocation5 + $0x20] sm:$0xff]
    %v80 = vld [vmem:[#allocation5 + $0x28] sm:$0xff]
    %v81 = vld [vmem:[#allocation5 + $0x30] sm:$0xff]
    %v82 = vld [vmem:[#allocation5 + $0x38] sm:$0xff]
    %v83 = vld [vmem:[#allocation8] sm:$0xff]
    %v84 = vld [vmem:[#allocation8 + $0x8] sm:$0xff]
    %v85 = vld [vmem:[#allocation8 + $0x10] sm:$0xff]
    %v86 = vld [vmem:[#allocation8 + $0x18] sm:$0xff]
    %v87 = vld [vmem:[#allocation11] sm:$0xf]
    %v89 = vlaneseq
    %v90 = vshrl.u32 %v89, 7
    %v91 = vsub.s32 0, %v90
    %v92 = vrot.slane %v87, %v91
    %v93 = vlaneseq
    %v94 = vshrl.u32 %v93, 7
    %v95 = vsub.s32 1, %v94
    %v96 = vrot.slane %v87, %v95
    %v97 = vlaneseq
    %v98 = vshrl.u32 %v97, 7
    %v99 = vsub.s32 2, %v98
    %v100 = vrot.slane %v87, %v99
    %v101 = vlaneseq
    %v102 = vshrl.u32 %v101, 7
    %v103 = vsub.s32 3, %v102
    %v104 = vrot.slane %v87, %v103
    %vm109 = vcmask 64512
    %v111 = vsel %vm109, %v75, 0
    %v114 = vsel %vm109, %v76, 0
    %v117 = vsel %vm109, %v77, 0
    %v120 = vsel %vm109, %v78, 0
    %v123 = vsel %vm109, %v79, 0
    %v126 = vsel %vm109, %v80, 0
    %v129 = vsel %vm109, %v81, 0
    %v132 = vsel %vm109, %v82, 0
    %134 = vmatprep.subr.mxu0 %v84
    %135 = vmatpush1.msra.mxu0 %v83
    %136 = vmatprep.subr.mxu0 0.0
    %137 = vmatpush1.msra.mxu0 0.0
    %138 = vmatprep.subr.mxu0 0.0
    %139 = vmatpush1.msra.mxu0 0.0
    %140 = vmatprep.subr.mxu0 0.0
    %141 = vmatpush1.msra.mxu0 0.0
    %142 = vmatprep.subr.mxu0 0.0
    %143 = vmatpush1.msra.mxu0 0.0
    %144 = vmatprep.subr.mxu0 0.0
    %145 = vmatpush1.msra.mxu0 0.0
    %146 = vmatprep.subr.mxu0 0.0
    %147 = vmatpush1.msra.mxu0 0.0
    %148 = vmatprep.subr.mxu0 0.0
    %149 = vmatpush1.msra.mxu0 0.0
    %150 = vmatprep.subr.mxu0 0.0
    %151 = vmatpush1.msra.mxu0 0.0
    %152 = vmatprep.subr.mxu0 0.0
    %153 = vmatpush1.msra.mxu0 0.0
    %154 = vmatprep.subr.mxu0 0.0
    %155 = vmatpush1.msra.mxu0 0.0
    %156 = vmatprep.subr.mxu0 0.0
    %157 = vmatpush1.msra.mxu0 0.0
    %158 = vmatprep.subr.mxu0 0.0
    %159 = vmatpush1.msra.mxu0 0.0
    %160 = vmatprep.subr.mxu0 0.0
    %161 = vmatpush1.msra.mxu0 0.0
    %162 = vmatprep.subr.mxu0 0.0
    %163 = vmatpush1.msra.mxu0 0.0
    %164 = vmatprep.subr.mxu0 0.0
    %165 = vmatpush1.msra.mxu0 0.0
    %166 = vmatprep.subr.mxu0 0.0
    %167 = vmatpush1.msra.mxu0 0.0
    %168 = vmatprep.subr.mxu0 0.0
    %169 = vmatpush1.msra.mxu0 0.0
    %170 = vmatprep.subr.mxu0 0.0
    %171 = vmatpush1.msra.mxu0 0.0
    %172 = vmatprep.subr.mxu0 0.0
    %173 = vmatpush1.msra.mxu0 0.0
    %174 = vmatprep.subr.mxu0 0.0
    %175 = vmatpush1.msra.mxu0 0.0
    %176 = vmatprep.subr.mxu0 0.0
    %177 = vmatpush1.msra.mxu0 0.0
    %178 = vmatprep.subr.mxu0 0.0
    %179 = vmatpush1.msra.mxu0 0.0
    %180 = vmatprep.subr.mxu0 0.0
    %181 = vmatpush1.msra.mxu0 0.0
    %182 = vmatprep.subr.mxu0 0.0
    %183 = vmatpush1.msra.mxu0 0.0
    %184 = vmatprep.subr.mxu0 0.0
    %185 = vmatpush1.msra.mxu0 0.0
    %186 = vmatprep.subr.mxu0 0.0
    %187 = vmatpush1.msra.mxu0 0.0
    %188 = vmatprep.subr.mxu0 0.0
    %189 = vmatpush1.msra.mxu0 0.0
    %190 = vmatprep.subr.mxu0 0.0
    %191 = vmatpush1.msra.mxu0 0.0
    %192 = vmatprep.subr.mxu0 0.0
    %193 = vmatpush1.msra.mxu0 0.0
    %194 = vmatprep.subr.mxu0 0.0
    %195 = vmatpush1.msra.mxu0 0.0
    %196 = vmatprep.subr.mxu0 0.0
    %197 = vmatpush1.msra.mxu0 0.0
    %198 = vmatprep.mubr.f32.mxu0 0.0
    %199 = vmatmul.mubr.f32.gmra.mrb[0].mxu0 %v111
    %v200 = vpop.f32.mrb[0].mxu0
    %v201 = vadd.f32 %v92, %v200
    %v202 = vpop.f32.mrb[0].mxu0
    %v203 = vadd.f32 %v96, %v202
    %204 = vmatprep.mubr.f32.mxu0 0.0
    %205 = vmatmul.mubr.f32.gmra.mrb[0].mxu0 %v114
    %v206 = vpop.f32.mrb[0].mxu0
    %v207 = vadd.f32 %v92, %v206
    %v208 = vpop.f32.mrb[0].mxu0
    %v209 = vadd.f32 %v96, %v208
    %210 = vmatprep.mubr.f32.mxu0 0.0
    %211 = vmatmul.mubr.f32.gmra.mrb[0].mxu0 %v117
    %v212 = vpop.f32.mrb[0].mxu0
    %v213 = vadd.f32 %v92, %v212
    %v214 = vpop.f32.mrb[0].mxu0
    %v215 = vadd.f32 %v96, %v214
    %216 = vmatprep.mubr.f32.mxu0 0.0
    %217 = vmatmul.mubr.f32.gmra.mrb[0].mxu0 %v120
    %v218 = vpop.f32.mrb[0].mxu0
    %v219 = vadd.f32 %v92, %v218
    %v220 = vpop.f32.mrb[0].mxu0
    %v221 = vadd.f32 %v96, %v220
    %222 = vmatprep.mubr.f32.mxu0 0.0
    %223 = vmatmul.mubr.f32.gmra.mrb[0].mxu0 %v123
    %v224 = vpop.f32.mrb[0].mxu0
    %v225 = vadd.f32 %v92, %v224
    %v226 = vpop.f32.mrb[0].mxu0
    %v227 = vadd.f32 %v96, %v226
    %228 = vmatprep.mubr.f32.mxu0 0.0
    %229 = vmatmul.mubr.f32.gmra.mrb[0].mxu0 %v126
    %v230 = vpop.f32.mrb[0].mxu0
    %v231 = vadd.f32 %v92, %v230
    %v232 = vpop.f32.mrb[0].mxu0
    %v233 = vadd.f32 %v96, %v232
    %234 = vmatprep.mubr.f32.mxu0 0.0
    %235 = vmatmul.mubr.f32.gmra.mrb[0].mxu0 %v129
    %v236 = vpop.f32.mrb[0].mxu0
    %v237 = vadd.f32 %v92, %v236
    %v238 = vpop.f32.mrb[0].mxu0
    %v239 = vadd.f32 %v96, %v238
    %240 = vmatprep.mubr.f32.mxu0 0.0
    %241 = vmatmul.mubr.f32.gmra.mrb[0].mxu0 %v132
    %v242 = vpop.f32.mrb[0].mxu0
    %v243 = vadd.f32 %v92, %v242
    %v244 = vpop.f32.mrb[0].mxu0
    %v245 = vadd.f32 %v96, %v244
    %246 = vdwg.mxu0
    %247 = vmatprep.subr.mxu0 %v86
    %248 = vmatpush1.msra.mxu0 %v85
    %249 = vmatprep.subr.mxu0 0.0
    %250 = vmatpush1.msra.mxu0 0.0
    %251 = vmatprep.subr.mxu0 0.0
    %252 = vmatpush1.msra.mxu0 0.0
    %253 = vmatprep.subr.mxu0 0.0
    %254 = vmatpush1.msra.mxu0 0.0
    %255 = vmatprep.subr.mxu0 0.0
    %256 = vmatpush1.msra.mxu0 0.0
    %257 = vmatprep.subr.mxu0 0.0
    %258 = vmatpush1.msra.mxu0 0.0
    %259 = vmatprep.subr.mxu0 0.0
    %260 = vmatpush1.msra.mxu0 0.0
    %261 = vmatprep.subr.mxu0 0.0
    %262 = vmatpush1.msra.mxu0 0.0
    %263 = vmatprep.subr.mxu0 0.0
    %264 = vmatpush1.msra.mxu0 0.0
    %265 = vmatprep.subr.mxu0 0.0
    %266 = vmatpush1.msra.mxu0 0.0
    %267 = vmatprep.subr.mxu0 0.0
    %268 = vmatpush1.msra.mxu0 0.0
    %269 = vmatprep.subr.mxu0 0.0
    %270 = vmatpush1.msra.mxu0 0.0
    %271 = vmatprep.subr.mxu0 0.0
    %272 = vmatpush1.msra.mxu0 0.0
    %273 = vmatprep.subr.mxu0 0.0
    %274 = vmatpush1.msra.mxu0 0.0
    %275 = vmatprep.subr.mxu0 0.0
    %276 = vmatpush1.msra.mxu0 0.0
    %277 = vmatprep.subr.mxu0 0.0
    %278 = vmatpush1.msra.mxu0 0.0
    %279 = vmatprep.subr.mxu0 0.0
    %280 = vmatpush1.msra.mxu0 0.0
    %281 = vmatprep.subr.mxu0 0.0
    %282 = vmatpush1.msra.mxu0 0.0
    %283 = vmatprep.subr.mxu0 0.0
    %284 = vmatpush1.msra.mxu0 0.0
    %285 = vmatprep.subr.mxu0 0.0
    %286 = vmatpush1.msra.mxu0 0.0
    %287 = vmatprep.subr.mxu0 0.0
    %288 = vmatpush1.msra.mxu0 0.0
    %289 = vmatprep.subr.mxu0 0.0
    %290 = vmatpush1.msra.mxu0 0.0
    %291 = vmatprep.subr.mxu0 0.0
    %292 = vmatpush1.msra.mxu0 0.0
    %293 = vmatprep.subr.mxu0 0.0
    %294 = vmatpush1.msra.mxu0 0.0
    %295 = vmatprep.subr.mxu0 0.0
    %296 = vmatpush1.msra.mxu0 0.0
    %297 = vmatprep.subr.mxu0 0.0
    %298 = vmatpush1.msra.mxu0 0.0
    %299 = vmatprep.subr.mxu0 0.0
    %300 = vmatpush1.msra.mxu0 0.0
    %301 = vmatprep.subr.mxu0 0.0
    %302 = vmatpush1.msra.mxu0 0.0
    %303 = vmatprep.subr.mxu0 0.0
    %304 = vmatpush1.msra.mxu0 0.0
    %305 = vmatprep.subr.mxu0 0.0
    %306 = vmatpush1.msra.mxu0 0.0
    %307 = vmatprep.subr.mxu0 0.0
    %308 = vmatpush1.msra.mxu0 0.0
    %309 = vmatprep.subr.mxu0 0.0
    %310 = vmatpush1.msra.mxu0 0.0
    %311 = vmatprep.mubr.f32.mxu0 0.0
    %312 = vmatmul.mubr.f32.gmra.mrb[0].mxu0 %v111
    %v313 = vpop.f32.mrb[0].mxu0
    %v314 = vadd.f32 %v100, %v313
    %v315 = vpop.f32.mrb[0].mxu0
    %v316 = vadd.f32 %v104, %v315
    %317 = vmatprep.mubr.f32.mxu0 0.0
    %318 = vmatmul.mubr.f32.gmra.mrb[0].mxu0 %v114
    %v319 = vpop.f32.mrb[0].mxu0
    %v320 = vadd.f32 %v100, %v319
    %v321 = vpop.f32.mrb[0].mxu0
    %v322 = vadd.f32 %v104, %v321
    %323 = vmatprep.mubr.f32.mxu0 0.0
    %324 = vmatmul.mubr.f32.gmra.mrb[0].mxu0 %v117
    %v325 = vpop.f32.mrb[0].mxu0
    %v326 = vadd.f32 %v100, %v325
    %v327 = vpop.f32.mrb[0].mxu0
    %v328 = vadd.f32 %v104, %v327
    %329 = vmatprep.mubr.f32.mxu0 0.0
    %330 = vmatmul.mubr.f32.gmra.mrb[0].mxu0 %v120
    %v331 = vpop.f32.mrb[0].mxu0
    %v332 = vadd.f32 %v100, %v331
    %v333 = vpop.f32.mrb[0].mxu0
    %v334 = vadd.f32 %v104, %v333
    %335 = vmatprep.mubr.f32.mxu0 0.0
    %336 = vmatmul.mubr.f32.gmra.mrb[0].mxu0 %v123
    %v337 = vpop.f32.mrb[0].mxu0
    %v338 = vadd.f32 %v100, %v337
    %v339 = vpop.f32.mrb[0].mxu0
    %v340 = vadd.f32 %v104, %v339
    %341 = vmatprep.mubr.f32.mxu0 0.0
    %342 = vmatmul.mubr.f32.gmra.mrb[0].mxu0 %v126
    %v343 = vpop.f32.mrb[0].mxu0
    %v344 = vadd.f32 %v100, %v343
    %v345 = vpop.f32.mrb[0].mxu0
    %v346 = vadd.f32 %v104, %v345
    %347 = vmatprep.mubr.f32.mxu0 0.0
    %348 = vmatmul.mubr.f32.gmra.mrb[0].mxu0 %v129
    %v349 = vpop.f32.mrb[0].mxu0
    %v350 = vadd.f32 %v100, %v349
    %v351 = vpop.f32.mrb[0].mxu0
    %v352 = vadd.f32 %v104, %v351
    %353 = vmatprep.mubr.f32.mxu0 0.0
    %354 = vmatmul.mubr.f32.gmra.mrb[0].mxu0 %v132
    %v355 = vpop.f32.mrb[0].mxu0
    %v356 = vadd.f32 %v100, %v355
    %v357 = vpop.f32.mrb[0].mxu0
    %v358 = vadd.f32 %v104, %v357
    %359 = vdwg.mxu0
    %360 = vst [vmem:[#allocation4] sm:$0xff] %v201
    %361 = vst [vmem:[#allocation4 + $0x8] sm:$0xff] %v203
    %362 = vst [vmem:[#allocation4 + $0x10] sm:$0xff] %v314
    %363 = vst [vmem:[#allocation4 + $0x18] sm:$0xff] %v316
    %364 = vst [vmem:[#allocation4 + $0x20] sm:$0xff] %v207
    %365 = vst [vmem:[#allocation4 + $0x28] sm:$0xff] %v209
    %366 = vst [vmem:[#allocation4 + $0x30] sm:$0xff] %v320
    %367 = vst [vmem:[#allocation4 + $0x38] sm:$0xff] %v322
    %368 = vst [vmem:[#allocation4 + $0x40] sm:$0xff] %v213
    %369 = vst [vmem:[#allocation4 + $0x48] sm:$0xff] %v215
    %370 = vst [vmem:[#allocation4 + $0x50] sm:$0xff] %v326
    %371 = vst [vmem:[#allocation4 + $0x58] sm:$0xff] %v328
    %372 = vst [vmem:[#allocation4 + $0x60] sm:$0xff] %v219
    %373 = vst [vmem:[#allocation4 + $0x68] sm:$0xff] %v221
    %374 = vst [vmem:[#allocation4 + $0x70] sm:$0xff] %v332
    %375 = vst [vmem:[#allocation4 + $0x78] sm:$0xff] %v334
    %376 = vst [vmem:[#allocation4 + $0x80] sm:$0xff] %v225
    %377 = vst [vmem:[#allocation4 + $0x88] sm:$0xff] %v227
    %378 = vst [vmem:[#allocation4 + $0x90] sm:$0xff] %v338
    %379 = vst [vmem:[#allocation4 + $0x98] sm:$0xff] %v340
    %380 = vst [vmem:[#allocation4 + $0xa0] sm:$0xff] %v231
    %381 = vst [vmem:[#allocation4 + $0xa8] sm:$0xff] %v233
    %382 = vst [vmem:[#allocation4 + $0xb0] sm:$0xff] %v344
    %383 = vst [vmem:[#allocation4 + $0xb8] sm:$0xff] %v346
    %384 = vst [vmem:[#allocation4 + $0xc0] sm:$0xff] %v237
    %385 = vst [vmem:[#allocation4 + $0xc8] sm:$0xff] %v239
    %386 = vst [vmem:[#allocation4 + $0xd0] sm:$0xff] %v350
    %387 = vst [vmem:[#allocation4 + $0xd8] sm:$0xff] %v352
    %388 = vst [vmem:[#allocation4 + $0xe0] sm:$0xff] %v243
    %389 = vst [vmem:[#allocation4 + $0xe8] sm:$0xff] %v245
    %390 = vst [vmem:[#allocation4 + $0xf0] sm:$0xff] %v356
    %391 = vst [vmem:[#allocation4 + $0xf8] sm:$0xff] %v358
    %v392 = vld [vmem:[#allocation10] sm:$0xff]
    %v393 = vld [vmem:[#allocation10 + $0x8] sm:$0xff]
    %v394 = vld [vmem:[#allocation10 + $0x10] sm:$0xff]
    %v395 = vld [vmem:[#allocation10 + $0x18] sm:$0xff]
    %v396 = vld [vmem:[#allocation10 + $0x20] sm:$0xff]
    %v397 = vld [vmem:[#allocation10 + $0x28] sm:$0xff]
    %v398 = vld [vmem:[#allocation10 + $0x30] sm:$0xff]
    %v399 = vld [vmem:[#allocation10 + $0x38] sm:$0xff]
    %v400 = vld [vmem:[#allocation10 + $0x40] sm:$0xff]
    %v401 = vld [vmem:[#allocation10 + $0x48] sm:$0xff]
    %v402 = vld [vmem:[#allocation10 + $0x50] sm:$0xff]
    %v403 = vld [vmem:[#allocation10 + $0x58] sm:$0xff]
    %v404 = vld [vmem:[#allocation10 + $0x60] sm:$0xff]
    %v405 = vld [vmem:[#allocation10 + $0x68] sm:$0xff]
    %v406 = vld [vmem:[#allocation10 + $0x70] sm:$0xff]
    %v407 = vld [vmem:[#allocation10 + $0x78] sm:$0xff]
    %v408 = vld [vmem:[#allocation10 + $0x80] sm:$0xff]
    %v409 = vld [vmem:[#allocation10 + $0x88] sm:$0xff]
    %v410 = vld [vmem:[#allocation10 + $0x90] sm:$0xff]
    %v411 = vld [vmem:[#allocation10 + $0x98] sm:$0xff]
    %v412 = vld [vmem:[#allocation10 + $0xa0] sm:$0xff]
    %v413 = vld [vmem:[#allocation10 + $0xa8] sm:$0xff]
    %v414 = vld [vmem:[#allocation10 + $0xb0] sm:$0xff]
    %v415 = vld [vmem:[#allocation10 + $0xb8] sm:$0xff]
    %v416 = vld [vmem:[#allocation10 + $0xc0] sm:$0xff]
    %v417 = vld [vmem:[#allocation10 + $0xc8] sm:$0xff]
    %v418 = vld [vmem:[#allocation10 + $0xd0] sm:$0xff]
    %v419 = vld [vmem:[#allocation10 + $0xd8] sm:$0xff]
    %v420 = vld [vmem:[#allocation10 + $0xe0] sm:$0xff]
    %v421 = vld [vmem:[#allocation10 + $0xe8] sm:$0xff]
    %v422 = vld [vmem:[#allocation10 + $0xf0] sm:$0xff]
    %v423 = vld [vmem:[#allocation10 + $0xf8] sm:$0xff]
    %v424 = vld [vmem:[#allocation10 + $0x100] sm:$0xff]
    %v425 = vld [vmem:[#allocation10 + $0x108] sm:$0xff]
    %v426 = vld [vmem:[#allocation10 + $0x110] sm:$0xff]
    %v427 = vld [vmem:[#allocation10 + $0x118] sm:$0xff]
    %v428 = vld [vmem:[#allocation10 + $0x120] sm:$0xff]
    %v429 = vld [vmem:[#allocation10 + $0x128] sm:$0xff]
    %v430 = vld [vmem:[#allocation10 + $0x130] sm:$0xff]
    %v431 = vld [vmem:[#allocation10 + $0x138] sm:$0xff]
    %v432 = vld [vmem:[#allocation10 + $0x140] sm:$0xff]
    %v433 = vld [vmem:[#allocation10 + $0x148] sm:$0xff]
    %v434 = vld [vmem:[#allocation10 + $0x150] sm:$0xff]
    %v435 = vld [vmem:[#allocation10 + $0x158] sm:$0xff]
    %v436 = vld [vmem:[#allocation10 + $0x160] sm:$0xff]
    %v437 = vld [vmem:[#allocation10 + $0x168] sm:$0xff]
    %v438 = vld [vmem:[#allocation10 + $0x170] sm:$0xff]
    %v439 = vld [vmem:[#allocation10 + $0x178] sm:$0xff]
    %v440 = vld [vmem:[#allocation10 + $0x180] sm:$0xff]
    %v441 = vld [vmem:[#allocation10 + $0x188] sm:$0xff]
    %v442 = vld [vmem:[#allocation10 + $0x190] sm:$0xff]
    %v443 = vld [vmem:[#allocation10 + $0x198] sm:$0xff]
    %v444 = vld [vmem:[#allocation10 + $0x1a0] sm:$0xff]
    %v445 = vld [vmem:[#allocation10 + $0x1a8] sm:$0xff]
    %v446 = vld [vmem:[#allocation10 + $0x1b0] sm:$0xff]
    %v447 = vld [vmem:[#allocation10 + $0x1b8] sm:$0xff]
    %v448 = vld [vmem:[#allocation10 + $0x1c0] sm:$0xff]
    %v449 = vld [vmem:[#allocation10 + $0x1c8] sm:$0xff]
    %v450 = vld [vmem:[#allocation10 + $0x1d0] sm:$0xff]
    %v451 = vld [vmem:[#allocation10 + $0x1d8] sm:$0xff]
    %v452 = vld [vmem:[#allocation10 + $0x1e0] sm:$0xff]
    %v453 = vld [vmem:[#allocation10 + $0x1e8] sm:$0xff]
    %v454 = vld [vmem:[#allocation10 + $0x1f0] sm:$0xff]
    %v455 = vld [vmem:[#allocation10 + $0x1f8] sm:$0xff]
    %v456 = vld [vmem:[#allocation2] sm:$0xff]
    %v457 = vld [vmem:[#allocation3] sm:$0xff]
    %v458 = vld [vmem:[#allocation4] sm:$0xff]
    %v459 = vld [vmem:[#allocation4 + $0x8] sm:$0xff]
    %v460 = vld [vmem:[#allocation4 + $0x10] sm:$0xff]
    %v461 = vld [vmem:[#allocation4 + $0x18] sm:$0xff]
    %462 = vmatprep.subr.mxu0 %v393
    %463 = vmatpush1.msra.mxu0 %v392
    %464 = vmatprep.subr.mxu0 %v397
    %465 = vmatpush1.msra.mxu0 %v396
    %466 = vmatprep.subr.mxu0 %v401
    %467 = vmatpush1.msra.mxu0 %v400
    %468 = vmatprep.subr.mxu0 %v405
    %469 = vmatpush1.msra.mxu0 %v404
    %470 = vmatprep.subr.mxu0 %v409
    %471 = vmatpush1.msra.mxu0 %v408
    %472 = vmatprep.subr.mxu0 %v413
    %473 = vmatpush1.msra.mxu0 %v412
    %474 = vmatprep.subr.mxu0 %v417
    %475 = vmatpush1.msra.mxu0 %v416
    %476 = vmatprep.subr.mxu0 %v421
    %477 = vmatpush1.msra.mxu0 %v420
    %478 = vmatprep.subr.mxu0 %v425
    %479 = vmatpush1.msra.mxu0 %v424
    %480 = vmatprep.subr.mxu0 %v429
    %481 = vmatpush1.msra.mxu0 %v428
    %482 = vmatprep.subr.mxu0 %v433
    %483 = vmatpush1.msra.mxu0 %v432
    %484 = vmatprep.subr.mxu0 %v437
    %485 = vmatpush1.msra.mxu0 %v436
    %486 = vmatprep.subr.mxu0 %v441
    %487 = vmatpush1.msra.mxu0 %v440
    %488 = vmatprep.subr.mxu0 %v445
    %489 = vmatpush1.msra.mxu0 %v444
    %490 = vmatprep.subr.mxu0 %v449
    %491 = vmatpush1.msra.mxu0 %v448
    %492 = vmatprep.subr.mxu0 %v453
    %493 = vmatpush1.msra.mxu0 %v452
    %494 = vmatprep.subr.mxu0 0.0
    %495 = vmatpush1.msra.mxu0 0.0
    %496 = vmatprep.subr.mxu0 0.0
    %497 = vmatpush1.msra.mxu0 0.0
    %498 = vmatprep.subr.mxu0 0.0
    %499 = vmatpush1.msra.mxu0 0.0
    %500 = vmatprep.subr.mxu0 0.0
    %501 = vmatpush1.msra.mxu0 0.0
    %502 = vmatprep.subr.mxu0 0.0
    %503 = vmatpush1.msra.mxu0 0.0
    %504 = vmatprep.subr.mxu0 0.0
    %505 = vmatpush1.msra.mxu0 0.0
    %506 = vmatprep.subr.mxu0 0.0
    %507 = vmatpush1.msra.mxu0 0.0
    %508 = vmatprep.subr.mxu0 0.0
    %509 = vmatpush1.msra.mxu0 0.0
    %510 = vmatprep.subr.mxu0 0.0
    %511 = vmatpush1.msra.mxu0 0.0
    %512 = vmatprep.subr.mxu0 0.0
    %513 = vmatpush1.msra.mxu0 0.0
    %514 = vmatprep.subr.mxu0 0.0
    %515 = vmatpush1.msra.mxu0 0.0
    %516 = vmatprep.subr.mxu0 0.0
    %517 = vmatpush1.msra.mxu0 0.0
    %518 = vmatprep.subr.mxu0 0.0
    %519 = vmatpush1.msra.mxu0 0.0
    %520 = vmatprep.subr.mxu0 0.0
    %521 = vmatpush1.msra.mxu0 0.0
    %522 = vmatprep.subr.mxu0 0.0
    %523 = vmatpush1.msra.mxu0 0.0
    %524 = vmatprep.subr.mxu0 0.0
    %525 = vmatpush1.msra.mxu0 0.0
    %526 = vmatprep.mubr.f32.mxu0 0.0
    %527 = vmatmul.mubr.f32.gmra.mrb[0].mxu0 %v456
    %v528 = vpop.f32.mrb[0].mxu0
    %v529 = vadd.f32 %v458, %v528
    %v530 = vpop.f32.mrb[0].mxu0
    %v531 = vadd.f32 %v459, %v530
    %532 = vdwg.mxu0
    %533 = vmatprep.subr.mxu0 %v395
    %534 = vmatpush1.msra.mxu0 %v394
    %535 = vmatprep.subr.mxu0 %v399
    %536 = vmatpush1.msra.mxu0 %v398
    %537 = vmatprep.subr.mxu0 %v403
    %538 = vmatpush1.msra.mxu0 %v402
    %539 = vmatprep.subr.mxu0 %v407
    %540 = vmatpush1.msra.mxu0 %v406
    %541 = vmatprep.subr.mxu0 %v411
    %542 = vmatpush1.msra.mxu0 %v410
    %543 = vmatprep.subr.mxu0 %v415
    %544 = vmatpush1.msra.mxu0 %v414
    %545 = vmatprep.subr.mxu0 %v419
    %546 = vmatpush1.msra.mxu0 %v418
    %547 = vmatprep.subr.mxu0 %v423
    %548 = vmatpush1.msra.mxu0 %v422
    %549 = vmatprep.subr.mxu0 %v427
    %550 = vmatpush1.msra.mxu0 %v426
    %551 = vmatprep.subr.mxu0 %v431
    %552 = vmatpush1.msra.mxu0 %v430
    %553 = vmatprep.subr.mxu0 %v435
    %554 = vmatpush1.msra.mxu0 %v434
    %555 = vmatprep.subr.mxu0 %v439
    %556 = vmatpush1.msra.mxu0 %v438
    %557 = vmatprep.subr.mxu0 %v443
    %558 = vmatpush1.msra.mxu0 %v442
    %559 = vmatprep.subr.mxu0 %v447
    %560 = vmatpush1.msra.mxu0 %v446
    %561 = vmatprep.subr.mxu0 %v451
    %562 = vmatpush1.msra.mxu0 %v450
    %563 = vmatprep.subr.mxu0 %v455
    %564 = vmatpush1.msra.mxu0 %v454
    %565 = vmatprep.subr.mxu0 0.0
    %566 = vmatpush1.msra.mxu0 0.0
    %567 = vmatprep.subr.mxu0 0.0
    %568 = vmatpush1.msra.mxu0 0.0
    %569 = vmatprep.subr.mxu0 0.0
    %570 = vmatpush1.msra.mxu0 0.0
    %571 = vmatprep.subr.mxu0 0.0
    %572 = vmatpush1.msra.mxu0 0.0
    %573 = vmatprep.subr.mxu0 0.0
    %574 = vmatpush1.msra.mxu0 0.0
    %575 = vmatprep.subr.mxu0 0.0
    %576 = vmatpush1.msra.mxu0 0.0
    %577 = vmatprep.subr.mxu0 0.0
    %578 = vmatpush1.msra.mxu0 0.0
    %579 = vmatprep.subr.mxu0 0.0
    %580 = vmatpush1.msra.mxu0 0.0
    %581 = vmatprep.subr.mxu0 0.0
    %582 = vmatpush1.msra.mxu0 0.0
    %583 = vmatprep.subr.mxu0 0.0
    %584 = vmatpush1.msra.mxu0 0.0
    %585 = vmatprep.subr.mxu0 0.0
    %586 = vmatpush1.msra.mxu0 0.0
    %587 = vmatprep.subr.mxu0 0.0
    %588 = vmatpush1.msra.mxu0 0.0
    %589 = vmatprep.subr.mxu0 0.0
    %590 = vmatpush1.msra.mxu0 0.0
    %591 = vmatprep.subr.mxu0 0.0
    %592 = vmatpush1.msra.mxu0 0.0
    %593 = vmatprep.subr.mxu0 0.0
    %594 = vmatpush1.msra.mxu0 0.0
    %595 = vmatprep.subr.mxu0 0.0
    %596 = vmatpush1.msra.mxu0 0.0
    %597 = vmatprep.mubr.f32.mxu0 0.0
    %598 = vmatmul.mubr.f32.gmra.mrb[0].mxu0 %v456
    %v599 = vpop.f32.mrb[0].mxu0
    %v600 = vadd.f32 %v460, %v599
    %v601 = vpop.f32.mrb[0].mxu0
    %v602 = vadd.f32 %v461, %v601
    %603 = vdwg.mxu0
    %v604 = vxor.u32 %v529, 2147483648
    %v605 = vmul.f32 %v604, 1.442695
    %v606 = vpow.pop %v605
    %v607 = vadd.f32 %v606, 1.0
    %v608 = vrcp.pop %v607
    %v609 = vmul.f32 1.0, %v608
    %v610 = vxor.u32 %v531, 2147483648
    %v611 = vmul.f32 %v610, 1.442695
    %v612 = vpow.pop %v611
    %v613 = vadd.f32 %v612, 1.0
    %v614 = vrcp.pop %v613
    %v615 = vmul.f32 1.0, %v614
    %v616 = vtanh.pop %v600
    %v617 = vxor.u32 %v602, 2147483648
    %v618 = vmul.f32 %v617, 1.442695
    %v619 = vpow.pop %v618
    %v620 = vadd.f32 %v619, 1.0
    %v621 = vrcp.pop %v620
    %v622 = vmul.f32 1.0, %v621
    %v623 = vmul.f32 %v615, %v457
    %v624 = vmul.f32 %v609, %v616
    %v625 = vadd.f32 %v623, %v624
    %v626 = vtanh.pop %v625
    %v627 = vmul.f32 %v622, %v626
    %s628 = scalar_lea.vmem [#allocation4], 32
    %v629 = vld [vmem:[%s628] sm:$0xff]
    %v630 = vld [vmem:[%s628 + $0x8] sm:$0xff]
    %v631 = vld [vmem:[%s628 + $0x10] sm:$0xff]
    %v632 = vld [vmem:[%s628 + $0x18] sm:$0xff]
    %633 = vmatprep.subr.mxu0 %v393
    %634 = vmatpush1.msra.mxu0 %v392
    %635 = vmatprep.subr.mxu0 %v397
    %636 = vmatpush1.msra.mxu0 %v396
    %637 = vmatprep.subr.mxu0 %v401
    %638 = vmatpush1.msra.mxu0 %v400
    %639 = vmatprep.subr.mxu0 %v405
    %640 = vmatpush1.msra.mxu0 %v404
    %641 = vmatprep.subr.mxu0 %v409
    %642 = vmatpush1.msra.mxu0 %v408
    %643 = vmatprep.subr.mxu0 %v413
    %644 = vmatpush1.msra.mxu0 %v412
    %645 = vmatprep.subr.mxu0 %v417
    %646 = vmatpush1.msra.mxu0 %v416
    %647 = vmatprep.subr.mxu0 %v421
    %648 = vmatpush1.msra.mxu0 %v420
    %649 = vmatprep.subr.mxu0 %v425
    %650 = vmatpush1.msra.mxu0 %v424
    %651 = vmatprep.subr.mxu0 %v429
    %652 = vmatpush1.msra.mxu0 %v428
    %653 = vmatprep.subr.mxu0 %v433
    %654 = vmatpush1.msra.mxu0 %v432
    %655 = vmatprep.subr.mxu0 %v437
    %656 = vmatpush1.msra.mxu0 %v436
    %657 = vmatprep.subr.mxu0 %v441
    %658 = vmatpush1.msra.mxu0 %v440
    %659 = vmatprep.subr.mxu0 %v445
    %660 = vmatpush1.msra.mxu0 %v444
    %661 = vmatprep.subr.mxu0 %v449
    %662 = vmatpush1.msra.mxu0 %v448
    %663 = vmatprep.subr.mxu0 %v453
    %664 = vmatpush1.msra.mxu0 %v452
    %665 = vmatprep.subr.mxu0 0.0
    %666 = vmatpush1.msra.mxu0 0.0
    %667 = vmatprep.subr.mxu0 0.0
    %668 = vmatpush1.msra.mxu0 0.0
    %669 = vmatprep.subr.mxu0 0.0
    %670 = vmatpush1.msra.mxu0 0.0
    %671 = vmatprep.subr.mxu0 0.0
    %672 = vmatpush1.msra.mxu0 0.0
    %673 = vmatprep.subr.mxu0 0.0
    %674 = vmatpush1.msra.mxu0 0.0
    %675 = vmatprep.subr.mxu0 0.0
    %676 = vmatpush1.msra.mxu0 0.0
    %677 = vmatprep.subr.mxu0 0.0
    %678 = vmatpush1.msra.mxu0 0.0
    %679 = vmatprep.subr.mxu0 0.0
    %680 = vmatpush1.msra.mxu0 0.0
    %681 = vmatprep.subr.mxu0 0.0
    %682 = vmatpush1.msra.mxu0 0.0
    %683 = vmatprep.subr.mxu0 0.0
    %684 = vmatpush1.msra.mxu0 0.0
    %685 = vmatprep.subr.mxu0 0.0
    %686 = vmatpush1.msra.mxu0 0.0
    %687 = vmatprep.subr.mxu0 0.0
    %688 = vmatpush1.msra.mxu0 0.0
    %689 = vmatprep.subr.mxu0 0.0
    %690 = vmatpush1.msra.mxu0 0.0
    %691 = vmatprep.subr.mxu0 0.0
    %692 = vmatpush1.msra.mxu0 0.0
    %693 = vmatprep.subr.mxu0 0.0
    %694 = vmatpush1.msra.mxu0 0.0
    %695 = vmatprep.subr.mxu0 0.0
    %696 = vmatpush1.msra.mxu0 0.0
    %697 = vmatprep.mubr.f32.mxu0 0.0
    %698 = vmatmul.mubr.f32.gmra.mrb[0].mxu0 %v627
    %v699 = vpop.f32.mrb[0].mxu0
    %v700 = vadd.f32 %v629, %v699
    %v701 = vpop.f32.mrb[0].mxu0
    %v702 = vadd.f32 %v630, %v701
    %703 = vdwg.mxu0
    %704 = vmatprep.subr.mxu0 %v395
    %705 = vmatpush1.msra.mxu0 %v394
    %706 = vmatprep.subr.mxu0 %v399
    %707 = vmatpush1.msra.mxu0 %v398
    %708 = vmatprep.subr.mxu0 %v403
    %709 = vmatpush1.msra.mxu0 %v402
    %710 = vmatprep.subr.mxu0 %v407
    %711 = vmatpush1.msra.mxu0 %v406
    %712 = vmatprep.subr.mxu0 %v411
    %713 = vmatpush1.msra.mxu0 %v410
    %714 = vmatprep.subr.mxu0 %v415
    %715 = vmatpush1.msra.mxu0 %v414
    %716 = vmatprep.subr.mxu0 %v419
    %717 = vmatpush1.msra.mxu0 %v418
    %718 = vmatprep.subr.mxu0 %v423
    %719 = vmatpush1.msra.mxu0 %v422
    %720 = vmatprep.subr.mxu0 %v427
    %721 = vmatpush1.msra.mxu0 %v426
    %722 = vmatprep.subr.mxu0 %v431
    %723 = vmatpush1.msra.mxu0 %v430
    %724 = vmatprep.subr.mxu0 %v435
    %725 = vmatpush1.msra.mxu0 %v434
    %726 = vmatprep.subr.mxu0 %v439
    %727 = vmatpush1.msra.mxu0 %v438
    %728 = vmatprep.subr.mxu0 %v443
    %729 = vmatpush1.msra.mxu0 %v442
    %730 = vmatprep.subr.mxu0 %v447
    %731 = vmatpush1.msra.mxu0 %v446
    %732 = vmatprep.subr.mxu0 %v451
    %733 = vmatpush1.msra.mxu0 %v450
    %734 = vmatprep.subr.mxu0 %v455
    %735 = vmatpush1.msra.mxu0 %v454
    %736 = vmatprep.subr.mxu0 0.0
    %737 = vmatpush1.msra.mxu0 0.0
    %738 = vmatprep.subr.mxu0 0.0
    %739 = vmatpush1.msra.mxu0 0.0
    %740 = vmatprep.subr.mxu0 0.0
    %741 = vmatpush1.msra.mxu0 0.0
    %742 = vmatprep.subr.mxu0 0.0
    %743 = vmatpush1.msra.mxu0 0.0
    %744 = vmatprep.subr.mxu0 0.0
    %745 = vmatpush1.msra.mxu0 0.0
    %746 = vmatprep.subr.mxu0 0.0
    %747 = vmatpush1.msra.mxu0 0.0
    %748 = vmatprep.subr.mxu0 0.0
    %749 = vmatpush1.msra.mxu0 0.0
    %750 = vmatprep.subr.mxu0 0.0
    %751 = vmatpush1.msra.mxu0 0.0
    %752 = vmatprep.subr.mxu0 0.0
    %753 = vmatpush1.msra.mxu0 0.0
    %754 = vmatprep.subr.mxu0 0.0
    %755 = vmatpush1.msra.mxu0 0.0
    %756 = vmatprep.subr.mxu0 0.0
    %757 = vmatpush1.msra.mxu0 0.0
    %758 = vmatprep.subr.mxu0 0.0
    %759 = vmatpush1.msra.mxu0 0.0
    %760 = vmatprep.subr.mxu0 0.0
    %761 = vmatpush1.msra.mxu0 0.0
    %762 = vmatprep.subr.mxu0 0.0
    %763 = vmatpush1.msra.mxu0 0.0
    %764 = vmatprep.subr.mxu0 0.0
    %765 = vmatpush1.msra.mxu0 0.0
    %766 = vmatprep.subr.mxu0 0.0
    %767 = vmatpush1.msra.mxu0 0.0
    %768 = vmatprep.mubr.f32.mxu0 0.0
    %769 = vmatmul.mubr.f32.gmra.mrb[0].mxu0 %v627
    %v770 = vpop.f32.mrb[0].mxu0
    %v771 = vadd.f32 %v631, %v770
    %v772 = vpop.f32.mrb[0].mxu0
    %v773 = vadd.f32 %v632, %v772
    %774 = vdwg.mxu0
    %v775 = vxor.u32 %v700, 2147483648
    %v776 = vmul.f32 %v775, 1.442695
    %v777 = vpow.pop %v776
    %v778 = vadd.f32 %v777, 1.0
    %v779 = vrcp.pop %v778
    %v780 = vmul.f32 1.0, %v779
    %v781 = vxor.u32 %v702, 2147483648
    %v782 = vmul.f32 %v781, 1.442695
    %v783 = vpow.pop %v782
    %v784 = vadd.f32 %v783, 1.0
    %v785 = vrcp.pop %v784
    %v786 = vmul.f32 1.0, %v785
    %v787 = vtanh.pop %v771
    %v788 = vxor.u32 %v773, 2147483648
    %v789 = vmul.f32 %v788, 1.442695
    %v790 = vpow.pop %v789
    %v791 = vadd.f32 %v790, 1.0
    %v792 = vrcp.pop %v791
    %v793 = vmul.f32 1.0, %v792
    %v794 = vmul.f32 %v786, %v625
    %v795 = vmul.f32 %v780, %v787
    %v796 = vadd.f32 %v794, %v795
    %v797 = vtanh.pop %v796
    %v798 = vmul.f32 %v793, %v797
    %s799 = scalar_lea.vmem [#allocation4], 64
    %v800 = vld [vmem:[%s799] sm:$0xff]
    %v801 = vld [vmem:[%s799 + $0x8] sm:$0xff]
    %v802 = vld [vmem:[%s799 + $0x10] sm:$0xff]
    %v803 = vld [vmem:[%s799 + $0x18] sm:$0xff]
    %804 = vmatprep.subr.mxu0 %v393
    %805 = vmatpush1.msra.mxu0 %v392
    %806 = vmatprep.subr.mxu0 %v397
    %807 = vmatpush1.msra.mxu0 %v396
    %808 = vmatprep.subr.mxu0 %v401
    %809 = vmatpush1.msra.mxu0 %v400
    %810 = vmatprep.subr.mxu0 %v405
    %811 = vmatpush1.msra.mxu0 %v404
    %812 = vmatprep.subr.mxu0 %v409
    %813 = vmatpush1.msra.mxu0 %v408
    %814 = vmatprep.subr.mxu0 %v413
    %815 = vmatpush1.msra.mxu0 %v412
    %816 = vmatprep.subr.mxu0 %v417
    %817 = vmatpush1.msra.mxu0 %v416
    %818 = vmatprep.subr.mxu0 %v421
    %819 = vmatpush1.msra.mxu0 %v420
    %820 = vmatprep.subr.mxu0 %v425
    %821 = vmatpush1.msra.mxu0 %v424
    %822 = vmatprep.subr.mxu0 %v429
    %823 = vmatpush1.msra.mxu0 %v428
    %824 = vmatprep.subr.mxu0 %v433
    %825 = vmatpush1.msra.mxu0 %v432
    %826 = vmatprep.subr.mxu0 %v437
    %827 = vmatpush1.msra.mxu0 %v436
    %828 = vmatprep.subr.mxu0 %v441
    %829 = vmatpush1.msra.mxu0 %v440
    %830 = vmatprep.subr.mxu0 %v445
    %831 = vmatpush1.msra.mxu0 %v444
    %832 = vmatprep.subr.mxu0 %v449
    %833 = vmatpush1.msra.mxu0 %v448
    %834 = vmatprep.subr.mxu0 %v453
    %835 = vmatpush1.msra.mxu0 %v452
    %836 = vmatprep.subr.mxu0 0.0
    %837 = vmatpush1.msra.mxu0 0.0
    %838 = vmatprep.subr.mxu0 0.0
    %839 = vmatpush1.msra.mxu0 0.0
    %840 = vmatprep.subr.mxu0 0.0
    %841 = vmatpush1.msra.mxu0 0.0
    %842 = vmatprep.subr.mxu0 0.0
    %843 = vmatpush1.msra.mxu0 0.0
    %844 = vmatprep.subr.mxu0 0.0
    %845 = vmatpush1.msra.mxu0 0.0
    %846 = vmatprep.subr.mxu0 0.0
    %847 = vmatpush1.msra.mxu0 0.0
    %848 = vmatprep.subr.mxu0 0.0
    %849 = vmatpush1.msra.mxu0 0.0
    %850 = vmatprep.subr.mxu0 0.0
    %851 = vmatpush1.msra.mxu0 0.0
    %852 = vmatprep.subr.mxu0 0.0
    %853 = vmatpush1.msra.mxu0 0.0
    %854 = vmatprep.subr.mxu0 0.0
    %855 = vmatpush1.msra.mxu0 0.0
    %856 = vmatprep.subr.mxu0 0.0
    %857 = vmatpush1.msra.mxu0 0.0
    %858 = vmatprep.subr.mxu0 0.0
    %859 = vmatpush1.msra.mxu0 0.0
    %860 = vmatprep.subr.mxu0 0.0
    %861 = vmatpush1.msra.mxu0 0.0
    %862 = vmatprep.subr.mxu0 0.0
    %863 = vmatpush1.msra.mxu0 0.0
    %864 = vmatprep.subr.mxu0 0.0
    %865 = vmatpush1.msra.mxu0 0.0
    %866 = vmatprep.subr.mxu0 0.0
    %867 = vmatpush1.msra.mxu0 0.0
    %868 = vmatprep.mubr.f32.mxu0 0.0
    %869 = vmatmul.mubr.f32.gmra.mrb[0].mxu0 %v798
    %v870 = vpop.f32.mrb[0].mxu0
    %v871 = vadd.f32 %v800, %v870
    %v872 = vpop.f32.mrb[0].mxu0
    %v873 = vadd.f32 %v801, %v872
    %874 = vdwg.mxu0
    %875 = vmatprep.subr.mxu0 %v395
    %876 = vmatpush1.msra.mxu0 %v394
    %877 = vmatprep.subr.mxu0 %v399
    %878 = vmatpush1.msra.mxu0 %v398
    %879 = vmatprep.subr.mxu0 %v403
    %880 = vmatpush1.msra.mxu0 %v402
    %881 = vmatprep.subr.mxu0 %v407
    %882 = vmatpush1.msra.mxu0 %v406
    %883 = vmatprep.subr.mxu0 %v411
    %884 = vmatpush1.msra.mxu0 %v410
    %885 = vmatprep.subr.mxu0 %v415
    %886 = vmatpush1.msra.mxu0 %v414
    %887 = vmatprep.subr.mxu0 %v419
    %888 = vmatpush1.msra.mxu0 %v418
    %889 = vmatprep.subr.mxu0 %v423
    %890 = vmatpush1.msra.mxu0 %v422
    %891 = vmatprep.subr.mxu0 %v427
    %892 = vmatpush1.msra.mxu0 %v426
    %893 = vmatprep.subr.mxu0 %v431
    %894 = vmatpush1.msra.mxu0 %v430
    %895 = vmatprep.subr.mxu0 %v435
    %896 = vmatpush1.msra.mxu0 %v434
    %897 = vmatprep.subr.mxu0 %v439
    %898 = vmatpush1.msra.mxu0 %v438
    %899 = vmatprep.subr.mxu0 %v443
    %900 = vmatpush1.msra.mxu0 %v442
    %901 = vmatprep.subr.mxu0 %v447
    %902 = vmatpush1.msra.mxu0 %v446
    %903 = vmatprep.subr.mxu0 %v451
    %904 = vmatpush1.msra.mxu0 %v450
    %905 = vmatprep.subr.mxu0 %v455
    %906 = vmatpush1.msra.mxu0 %v454
    %907 = vmatprep.subr.mxu0 0.0
    %908 = vmatpush1.msra.mxu0 0.0
    %909 = vmatprep.subr.mxu0 0.0
    %910 = vmatpush1.msra.mxu0 0.0
    %911 = vmatprep.subr.mxu0 0.0
    %912 = vmatpush1.msra.mxu0 0.0
    %913 = vmatprep.subr.mxu0 0.0
    %914 = vmatpush1.msra.mxu0 0.0
    %915 = vmatprep.subr.mxu0 0.0
    %916 = vmatpush1.msra.mxu0 0.0
    %917 = vmatprep.subr.mxu0 0.0
    %918 = vmatpush1.msra.mxu0 0.0
    %919 = vmatprep.subr.mxu0 0.0
    %920 = vmatpush1.msra.mxu0 0.0
    %921 = vmatprep.subr.mxu0 0.0
    %922 = vmatpush1.msra.mxu0 0.0
    %923 = vmatprep.subr.mxu0 0.0
    %924 = vmatpush1.msra.mxu0 0.0
    %925 = vmatprep.subr.mxu0 0.0
    %926 = vmatpush1.msra.mxu0 0.0
    %927 = vmatprep.subr.mxu0 0.0
    %928 = vmatpush1.msra.mxu0 0.0
    %929 = vmatprep.subr.mxu0 0.0
    %930 = vmatpush1.msra.mxu0 0.0
    %931 = vmatprep.subr.mxu0 0.0
    %932 = vmatpush1.msra.mxu0 0.0
    %933 = vmatprep.subr.mxu0 0.0
    %934 = vmatpush1.msra.mxu0 0.0
    %935 = vmatprep.subr.mxu0 0.0
    %936 = vmatpush1.msra.mxu0 0.0
    %937 = vmatprep.subr.mxu0 0.0
    %938 = vmatpush1.msra.mxu0 0.0
    %939 = vmatprep.mubr.f32.mxu0 0.0
    %940 = vmatmul.mubr.f32.gmra.mrb[0].mxu0 %v798
    %v941 = vpop.f32.mrb[0].mxu0
    %v942 = vadd.f32 %v802, %v941
    %v943 = vpop.f32.mrb[0].mxu0
    %v944 = vadd.f32 %v803, %v943
    %945 = vdwg.mxu0
    %v946 = vxor.u32 %v871, 2147483648
    %v947 = vmul.f32 %v946, 1.442695
    %v948 = vpow.pop %v947
    %v949 = vadd.f32 %v948, 1.0
    %v950 = vrcp.pop %v949
    %v951 = vmul.f32 1.0, %v950
    %v952 = vxor.u32 %v873, 2147483648
    %v953 = vmul.f32 %v952, 1.442695
    %v954 = vpow.pop %v953
    %v955 = vadd.f32 %v954, 1.0
    %v956 = vrcp.pop %v955
    %v957 = vmul.f32 1.0, %v956
    %v958 = vtanh.pop %v942
    %v959 = vxor.u32 %v944, 2147483648
    %v960 = vmul.f32 %v959, 1.442695
    %v961 = vpow.pop %v960
    %v962 = vadd.f32 %v961, 1.0
    %v963 = vrcp.pop %v962
    %v964 = vmul.f32 1.0, %v963
    %v965 = vmul.f32 %v957, %v796
    %v966 = vmul.f32 %v951, %v958
    %v967 = vadd.f32 %v965, %v966
    %v968 = vtanh.pop %v967
    %v969 = vmul.f32 %v964, %v968
    %s970 = scalar_lea.vmem [#allocation4], 96
    %v971 = vld [vmem:[%s970] sm:$0xff]
    %v972 = vld [vmem:[%s970 + $0x8] sm:$0xff]
    %v973 = vld [vmem:[%s970 + $0x10] sm:$0xff]
    %v974 = vld [vmem:[%s970 + $0x18] sm:$0xff]
    %975 = vmatprep.subr.mxu0 %v393
    %976 = vmatpush1.msra.mxu0 %v392
    %977 = vmatprep.subr.mxu0 %v397
    %978 = vmatpush1.msra.mxu0 %v396
    %979 = vmatprep.subr.mxu0 %v401
    %980 = vmatpush1.msra.mxu0 %v400
    %981 = vmatprep.subr.mxu0 %v405
    %982 = vmatpush1.msra.mxu0 %v404
    %983 = vmatprep.subr.mxu0 %v409
    %984 = vmatpush1.msra.mxu0 %v408
    %985 = vmatprep.subr.mxu0 %v413
    %986 = vmatpush1.msra.mxu0 %v412
    %987 = vmatprep.subr.mxu0 %v417
    %988 = vmatpush1.msra.mxu0 %v416
    %989 = vmatprep.subr.mxu0 %v421
    %990 = vmatpush1.msra.mxu0 %v420
    %991 = vmatprep.subr.mxu0 %v425
    %992 = vmatpush1.msra.mxu0 %v424
    %993 = vmatprep.subr.mxu0 %v429
    %994 = vmatpush1.msra.mxu0 %v428
    %995 = vmatprep.subr.mxu0 %v433
    %996 = vmatpush1.msra.mxu0 %v432
    %997 = vmatprep.subr.mxu0 %v437
    %998 = vmatpush1.msra.mxu0 %v436
    %999 = vmatprep.subr.mxu0 %v441
    %1000 = vmatpush1.msra.mxu0 %v440
    %1001 = vmatprep.subr.mxu0 %v445
    %1002 = vmatpush1.msra.mxu0 %v444
    %1003 = vmatprep.subr.mxu0 %v449
    %1004 = vmatpush1.msra.mxu0 %v448
    %1005 = vmatprep.subr.mxu0 %v453
    %1006 = vmatpush1.msra.mxu0 %v452
    %1007 = vmatprep.subr.mxu0 0.0
    %1008 = vmatpush1.msra.mxu0 0.0
    %1009 = vmatprep.subr.mxu0 0.0
    %1010 = vmatpush1.msra.mxu0 0.0
    %1011 = vmatprep.subr.mxu0 0.0
    %1012 = vmatpush1.msra.mxu0 0.0
    %1013 = vmatprep.subr.mxu0 0.0
    %1014 = vmatpush1.msra.mxu0 0.0
    %1015 = vmatprep.subr.mxu0 0.0
    %1016 = vmatpush1.msra.mxu0 0.0
    %1017 = vmatprep.subr.mxu0 0.0
    %1018 = vmatpush1.msra.mxu0 0.0
    %1019 = vmatprep.subr.mxu0 0.0
    %1020 = vmatpush1.msra.mxu0 0.0
    %1021 = vmatprep.subr.mxu0 0.0
    %1022 = vmatpush1.msra.mxu0 0.0
    %1023 = vmatprep.subr.mxu0 0.0
    %1024 = vmatpush1.msra.mxu0 0.0
    %1025 = vmatprep.subr.mxu0 0.0
    %1026 = vmatpush1.msra.mxu0 0.0
    %1027 = vmatprep.subr.mxu0 0.0
    %1028 = vmatpush1.msra.mxu0 0.0
    %1029 = vmatprep.subr.mxu0 0.0
    %1030 = vmatpush1.msra.mxu0 0.0
    %1031 = vmatprep.subr.mxu0 0.0
    %1032 = vmatpush1.msra.mxu0 0.0
    %1033 = vmatprep.subr.mxu0 0.0
    %1034 = vmatpush1.msra.mxu0 0.0
    %1035 = vmatprep.subr.mxu0 0.0
    %1036 = vmatpush1.msra.mxu0 0.0
    %1037 = vmatprep.subr.mxu0 0.0
    %1038 = vmatpush1.msra.mxu0 0.0
    %1039 = vmatprep.mubr.f32.mxu0 0.0
    %1040 = vmatmul.mubr.f32.gmra.mrb[0].mxu0 %v969
    %v1041 = vpop.f32.mrb[0].mxu0
    %v1042 = vadd.f32 %v971, %v1041
    %v1043 = vpop.f32.mrb[0].mxu0
    %v1044 = vadd.f32 %v972, %v1043
    %1045 = vdwg.mxu0
    %1046 = vmatprep.subr.mxu0 %v395
    %1047 = vmatpush1.msra.mxu0 %v394
    %1048 = vmatprep.subr.mxu0 %v399
    %1049 = vmatpush1.msra.mxu0 %v398
    %1050 = vmatprep.subr.mxu0 %v403
    %1051 = vmatpush1.msra.mxu0 %v402
    %1052 = vmatprep.subr.mxu0 %v407
    %1053 = vmatpush1.msra.mxu0 %v406
    %1054 = vmatprep.subr.mxu0 %v411
    %1055 = vmatpush1.msra.mxu0 %v410
    %1056 = vmatprep.subr.mxu0 %v415
    %1057 = vmatpush1.msra.mxu0 %v414
    %1058 = vmatprep.subr.mxu0 %v419
    %1059 = vmatpush1.msra.mxu0 %v418
    %1060 = vmatprep.subr.mxu0 %v423
    %1061 = vmatpush1.msra.mxu0 %v422
    %1062 = vmatprep.subr.mxu0 %v427
    %1063 = vmatpush1.msra.mxu0 %v426
    %1064 = vmatprep.subr.mxu0 %v431
    %1065 = vmatpush1.msra.mxu0 %v430
    %1066 = vmatprep.subr.mxu0 %v435
    %1067 = vmatpush1.msra.mxu0 %v434
    %1068 = vmatprep.subr.mxu0 %v439
    %1069 = vmatpush1.msra.mxu0 %v438
    %1070 = vmatprep.subr.mxu0 %v443
    %1071 = vmatpush1.msra.mxu0 %v442
    %1072 = vmatprep.subr.mxu0 %v447
    %1073 = vmatpush1.msra.mxu0 %v446
    %1074 = vmatprep.subr.mxu0 %v451
    %1075 = vmatpush1.msra.mxu0 %v450
    %1076 = vmatprep.subr.mxu0 %v455
    %1077 = vmatpush1.msra.mxu0 %v454
    %1078 = vmatprep.subr.mxu0 0.0
    %1079 = vmatpush1.msra.mxu0 0.0
    %1080 = vmatprep.subr.mxu0 0.0
    %1081 = vmatpush1.msra.mxu0 0.0
    %1082 = vmatprep.subr.mxu0 0.0
    %1083 = vmatpush1.msra.mxu0 0.0
    %1084 = vmatprep.subr.mxu0 0.0
    %1085 = vmatpush1.msra.mxu0 0.0
    %1086 = vmatprep.subr.mxu0 0.0
    %1087 = vmatpush1.msra.mxu0 0.0
    %1088 = vmatprep.subr.mxu0 0.0
    %1089 = vmatpush1.msra.mxu0 0.0
    %1090 = vmatprep.subr.mxu0 0.0
    %1091 = vmatpush1.msra.mxu0 0.0
    %1092 = vmatprep.subr.mxu0 0.0
    %1093 = vmatpush1.msra.mxu0 0.0
    %1094 = vmatprep.subr.mxu0 0.0
    %1095 = vmatpush1.msra.mxu0 0.0
    %1096 = vmatprep.subr.mxu0 0.0
    %1097 = vmatpush1.msra.mxu0 0.0
    %1098 = vmatprep.subr.mxu0 0.0
    %1099 = vmatpush1.msra.mxu0 0.0
    %1100 = vmatprep.subr.mxu0 0.0
    %1101 = vmatpush1.msra.mxu0 0.0
    %1102 = vmatprep.subr.mxu0 0.0
    %1103 = vmatpush1.msra.mxu0 0.0
    %1104 = vmatprep.subr.mxu0 0.0
    %1105 = vmatpush1.msra.mxu0 0.0
    %1106 = vmatprep.subr.mxu0 0.0
    %1107 = vmatpush1.msra.mxu0 0.0
    %1108 = vmatprep.subr.mxu0 0.0
    %1109 = vmatpush1.msra.mxu0 0.0
    %1110 = vmatprep.mubr.f32.mxu0 0.0
    %1111 = vmatmul.mubr.f32.gmra.mrb[0].mxu0 %v969
    %v1112 = vpop.f32.mrb[0].mxu0
    %v1113 = vadd.f32 %v973, %v1112
    %v1114 = vpop.f32.mrb[0].mxu0
    %v1115 = vadd.f32 %v974, %v1114
    %1116 = vdwg.mxu0
    %v1117 = vxor.u32 %v1042, 2147483648
    %v1118 = vmul.f32 %v1117, 1.442695
    %v1119 = vpow.pop %v1118
    %v1120 = vadd.f32 %v1119, 1.0
    %v1121 = vrcp.pop %v1120
    %v1122 = vmul.f32 1.0, %v1121
    %v1123 = vxor.u32 %v1044, 2147483648
    %v1124 = vmul.f32 %v1123, 1.442695
    %v1125 = vpow.pop %v1124
    %v1126 = vadd.f32 %v1125, 1.0
    %v1127 = vrcp.pop %v1126
    %v1128 = vmul.f32 1.0, %v1127
    %v1129 = vtanh.pop %v1113
    %v1130 = vxor.u32 %v1115, 2147483648
    %v1131 = vmul.f32 %v1130, 1.442695
    %v1132 = vpow.pop %v1131
    %v1133 = vadd.f32 %v1132, 1.0
    %v1134 = vrcp.pop %v1133
    %v1135 = vmul.f32 1.0, %v1134
    %v1136 = vmul.f32 %v1128, %v967
    %v1137 = vmul.f32 %v1122, %v1129
    %v1138 = vadd.f32 %v1136, %v1137
    %v1139 = vtanh.pop %v1138
    %v1140 = vmul.f32 %v1135, %v1139
    %s1141 = scalar_lea.vmem [#allocation4], 128
    %v1142 = vld [vmem:[%s1141] sm:$0xff]
    %v1143 = vld [vmem:[%s1141 + $0x8] sm:$0xff]
    %v1144 = vld [vmem:[%s1141 + $0x10] sm:$0xff]
    %v1145 = vld [vmem:[%s1141 + $0x18] sm:$0xff]
    %1146 = vmatprep.subr.mxu0 %v393
    %1147 = vmatpush1.msra.mxu0 %v392
    %1148 = vmatprep.subr.mxu0 %v397
    %1149 = vmatpush1.msra.mxu0 %v396
    %1150 = vmatprep.subr.mxu0 %v401
    %1151 = vmatpush1.msra.mxu0 %v400
    %1152 = vmatprep.subr.mxu0 %v405
    %1153 = vmatpush1.msra.mxu0 %v404
    %1154 = vmatprep.subr.mxu0 %v409
    %1155 = vmatpush1.msra.mxu0 %v408
    %1156 = vmatprep.subr.mxu0 %v413
    %1157 = vmatpush1.msra.mxu0 %v412
    %1158 = vmatprep.subr.mxu0 %v417
    %1159 = vmatpush1.msra.mxu0 %v416
    %1160 = vmatprep.subr.mxu0 %v421
    %1161 = vmatpush1.msra.mxu0 %v420
    %1162 = vmatprep.subr.mxu0 %v425
    %1163 = vmatpush1.msra.mxu0 %v424
    %1164 = vmatprep.subr.mxu0 %v429
    %1165 = vmatpush1.msra.mxu0 %v428
    %1166 = vmatprep.subr.mxu0 %v433
    %1167 = vmatpush1.msra.mxu0 %v432
    %1168 = vmatprep.subr.mxu0 %v437
    %1169 = vmatpush1.msra.mxu0 %v436
    %1170 = vmatprep.subr.mxu0 %v441
    %1171 = vmatpush1.msra.mxu0 %v440
    %1172 = vmatprep.subr.mxu0 %v445
    %1173 = vmatpush1.msra.mxu0 %v444
    %1174 = vmatprep.subr.mxu0 %v449
    %1175 = vmatpush1.msra.mxu0 %v448
    %1176 = vmatprep.subr.mxu0 %v453
    %1177 = vmatpush1.msra.mxu0 %v452
    %1178 = vmatprep.subr.mxu0 0.0
    %1179 = vmatpush1.msra.mxu0 0.0
    %1180 = vmatprep.subr.mxu0 0.0
    %1181 = vmatpush1.msra.mxu0 0.0
    %1182 = vmatprep.subr.mxu0 0.0
    %1183 = vmatpush1.msra.mxu0 0.0
    %1184 = vmatprep.subr.mxu0 0.0
    %1185 = vmatpush1.msra.mxu0 0.0
    %1186 = vmatprep.subr.mxu0 0.0
    %1187 = vmatpush1.msra.mxu0 0.0
    %1188 = vmatprep.subr.mxu0 0.0
    %1189 = vmatpush1.msra.mxu0 0.0
    %1190 = vmatprep.subr.mxu0 0.0
    %1191 = vmatpush1.msra.mxu0 0.0
    %1192 = vmatprep.subr.mxu0 0.0
    %1193 = vmatpush1.msra.mxu0 0.0
    %1194 = vmatprep.subr.mxu0 0.0
    %1195 = vmatpush1.msra.mxu0 0.0
    %1196 = vmatprep.subr.mxu0 0.0
    %1197 = vmatpush1.msra.mxu0 0.0
    %1198 = vmatprep.subr.mxu0 0.0
    %1199 = vmatpush1.msra.mxu0 0.0
    %1200 = vmatprep.subr.mxu0 0.0
    %1201 = vmatpush1.msra.mxu0 0.0
    %1202 = vmatprep.subr.mxu0 0.0
    %1203 = vmatpush1.msra.mxu0 0.0
    %1204 = vmatprep.subr.mxu0 0.0
    %1205 = vmatpush1.msra.mxu0 0.0
    %1206 = vmatprep.subr.mxu0 0.0
    %1207 = vmatpush1.msra.mxu0 0.0
    %1208 = vmatprep.subr.mxu0 0.0
    %1209 = vmatpush1.msra.mxu0 0.0
    %1210 = vmatprep.mubr.f32.mxu0 0.0
    %1211 = vmatmul.mubr.f32.gmra.mrb[0].mxu0 %v1140
    %v1212 = vpop.f32.mrb[0].mxu0
    %v1213 = vadd.f32 %v1142, %v1212
    %v1214 = vpop.f32.mrb[0].mxu0
    %v1215 = vadd.f32 %v1143, %v1214
    %1216 = vdwg.mxu0
    %1217 = vmatprep.subr.mxu0 %v395
    %1218 = vmatpush1.msra.mxu0 %v394
    %1219 = vmatprep.subr.mxu0 %v399
    %1220 = vmatpush1.msra.mxu0 %v398
    %1221 = vmatprep.subr.mxu0 %v403
    %1222 = vmatpush1.msra.mxu0 %v402
    %1223 = vmatprep.subr.mxu0 %v407
    %1224 = vmatpush1.msra.mxu0 %v406
    %1225 = vmatprep.subr.mxu0 %v411
    %1226 = vmatpush1.msra.mxu0 %v410
    %1227 = vmatprep.subr.mxu0 %v415
    %1228 = vmatpush1.msra.mxu0 %v414
    %1229 = vmatprep.subr.mxu0 %v419
    %1230 = vmatpush1.msra.mxu0 %v418
    %1231 = vmatprep.subr.mxu0 %v423
    %1232 = vmatpush1.msra.mxu0 %v422
    %1233 = vmatprep.subr.mxu0 %v427
    %1234 = vmatpush1.msra.mxu0 %v426
    %1235 = vmatprep.subr.mxu0 %v431
    %1236 = vmatpush1.msra.mxu0 %v430
    %1237 = vmatprep.subr.mxu0 %v435
    %1238 = vmatpush1.msra.mxu0 %v434
    %1239 = vmatprep.subr.mxu0 %v439
    %1240 = vmatpush1.msra.mxu0 %v438
    %1241 = vmatprep.subr.mxu0 %v443
    %1242 = vmatpush1.msra.mxu0 %v442
    %1243 = vmatprep.subr.mxu0 %v447
    %1244 = vmatpush1.msra.mxu0 %v446
    %1245 = vmatprep.subr.mxu0 %v451
    %1246 = vmatpush1.msra.mxu0 %v450
    %1247 = vmatprep.subr.mxu0 %v455
    %1248 = vmatpush1.msra.mxu0 %v454
    %1249 = vmatprep.subr.mxu0 0.0
    %1250 = vmatpush1.msra.mxu0 0.0
    %1251 = vmatprep.subr.mxu0 0.0
    %1252 = vmatpush1.msra.mxu0 0.0
    %1253 = vmatprep.subr.mxu0 0.0
    %1254 = vmatpush1.msra.mxu0 0.0
    %1255 = vmatprep.subr.mxu0 0.0
    %1256 = vmatpush1.msra.mxu0 0.0
    %1257 = vmatprep.subr.mxu0 0.0
    %1258 = vmatpush1.msra.mxu0 0.0
    %1259 = vmatprep.subr.mxu0 0.0
    %1260 = vmatpush1.msra.mxu0 0.0
    %1261 = vmatprep.subr.mxu0 0.0
    %1262 = vmatpush1.msra.mxu0 0.0
    %1263 = vmatprep.subr.mxu0 0.0
    %1264 = vmatpush1.msra.mxu0 0.0
    %1265 = vmatprep.subr.mxu0 0.0
    %1266 = vmatpush1.msra.mxu0 0.0
    %1267 = vmatprep.subr.mxu0 0.0
    %1268 = vmatpush1.msra.mxu0 0.0
    %1269 = vmatprep.subr.mxu0 0.0
    %1270 = vmatpush1.msra.mxu0 0.0
    %1271 = vmatprep.subr.mxu0 0.0
    %1272 = vmatpush1.msra.mxu0 0.0
    %1273 = vmatprep.subr.mxu0 0.0
    %1274 = vmatpush1.msra.mxu0 0.0
    %1275 = vmatprep.subr.mxu0 0.0
    %1276 = vmatpush1.msra.mxu0 0.0
    %1277 = vmatprep.subr.mxu0 0.0
    %1278 = vmatpush1.msra.mxu0 0.0
    %1279 = vmatprep.subr.mxu0 0.0
    %1280 = vmatpush1.msra.mxu0 0.0
    %1281 = vmatprep.mubr.f32.mxu0 0.0
    %1282 = vmatmul.mubr.f32.gmra.mrb[0].mxu0 %v1140
    %v1283 = vpop.f32.mrb[0].mxu0
    %v1284 = vadd.f32 %v1144, %v1283
    %v1285 = vpop.f32.mrb[0].mxu0
    %v1286 = vadd.f32 %v1145, %v1285
    %1287 = vdwg.mxu0
    %v1288 = vxor.u32 %v1213, 2147483648
    %v1289 = vmul.f32 %v1288, 1.442695
    %v1290 = vpow.pop %v1289
    %v1291 = vadd.f32 %v1290, 1.0
    %v1292 = vrcp.pop %v1291
    %v1293 = vmul.f32 1.0, %v1292
    %v1294 = vxor.u32 %v1215, 2147483648
    %v1295 = vmul.f32 %v1294, 1.442695
    %v1296 = vpow.pop %v1295
    %v1297 = vadd.f32 %v1296, 1.0
    %v1298 = vrcp.pop %v1297
    %v1299 = vmul.f32 1.0, %v1298
    %v1300 = vtanh.pop %v1284
    %v1301 = vxor.u32 %v1286, 2147483648
    %v1302 = vmul.f32 %v1301, 1.442695
    %v1303 = vpow.pop %v1302
    %v1304 = vadd.f32 %v1303, 1.0
    %v1305 = vrcp.pop %v1304
    %v1306 = vmul.f32 1.0, %v1305
    %v1307 = vmul.f32 %v1299, %v1138
    %v1308 = vmul.f32 %v1293, %v1300
    %v1309 = vadd.f32 %v1307, %v1308
    %v1310 = vtanh.pop %v1309
    %v1311 = vmul.f32 %v1306, %v1310
    %s1312 = scalar_lea.vmem [#allocation4], 160
    %v1313 = vld [vmem:[%s1312] sm:$0xff]
    %v1314 = vld [vmem:[%s1312 + $0x8] sm:$0xff]
    %v1315 = vld [vmem:[%s1312 + $0x10] sm:$0xff]
    %v1316 = vld [vmem:[%s1312 + $0x18] sm:$0xff]
    %1317 = vmatprep.subr.mxu0 %v393
    %1318 = vmatpush1.msra.mxu0 %v392
    %1319 = vmatprep.subr.mxu0 %v397
    %1320 = vmatpush1.msra.mxu0 %v396
    %1321 = vmatprep.subr.mxu0 %v401
    %1322 = vmatpush1.msra.mxu0 %v400
    %1323 = vmatprep.subr.mxu0 %v405
    %1324 = vmatpush1.msra.mxu0 %v404
    %1325 = vmatprep.subr.mxu0 %v409
    %1326 = vmatpush1.msra.mxu0 %v408
    %1327 = vmatprep.subr.mxu0 %v413
    %1328 = vmatpush1.msra.mxu0 %v412
    %1329 = vmatprep.subr.mxu0 %v417
    %1330 = vmatpush1.msra.mxu0 %v416
    %1331 = vmatprep.subr.mxu0 %v421
    %1332 = vmatpush1.msra.mxu0 %v420
    %1333 = vmatprep.subr.mxu0 %v425
    %1334 = vmatpush1.msra.mxu0 %v424
    %1335 = vmatprep.subr.mxu0 %v429
    %1336 = vmatpush1.msra.mxu0 %v428
    %1337 = vmatprep.subr.mxu0 %v433
    %1338 = vmatpush1.msra.mxu0 %v432
    %1339 = vmatprep.subr.mxu0 %v437
    %1340 = vmatpush1.msra.mxu0 %v436
    %1341 = vmatprep.subr.mxu0 %v441
    %1342 = vmatpush1.msra.mxu0 %v440
    %1343 = vmatprep.subr.mxu0 %v445
    %1344 = vmatpush1.msra.mxu0 %v444
    %1345 = vmatprep.subr.mxu0 %v449
    %1346 = vmatpush1.msra.mxu0 %v448
    %1347 = vmatprep.subr.mxu0 %v453
    %1348 = vmatpush1.msra.mxu0 %v452
    %1349 = vmatprep.subr.mxu0 0.0
    %1350 = vmatpush1.msra.mxu0 0.0
    %1351 = vmatprep.subr.mxu0 0.0
    %1352 = vmatpush1.msra.mxu0 0.0
    %1353 = vmatprep.subr.mxu0 0.0
    %1354 = vmatpush1.msra.mxu0 0.0
    %1355 = vmatprep.subr.mxu0 0.0
    %1356 = vmatpush1.msra.mxu0 0.0
    %1357 = vmatprep.subr.mxu0 0.0
    %1358 = vmatpush1.msra.mxu0 0.0
    %1359 = vmatprep.subr.mxu0 0.0
    %1360 = vmatpush1.msra.mxu0 0.0
    %1361 = vmatprep.subr.mxu0 0.0
    %1362 = vmatpush1.msra.mxu0 0.0
    %1363 = vmatprep.subr.mxu0 0.0
    %1364 = vmatpush1.msra.mxu0 0.0
    %1365 = vmatprep.subr.mxu0 0.0
    %1366 = vmatpush1.msra.mxu0 0.0
    %1367 = vmatprep.subr.mxu0 0.0
    %1368 = vmatpush1.msra.mxu0 0.0
    %1369 = vmatprep.subr.mxu0 0.0
    %1370 = vmatpush1.msra.mxu0 0.0
    %1371 = vmatprep.subr.mxu0 0.0
    %1372 = vmatpush1.msra.mxu0 0.0
    %1373 = vmatprep.subr.mxu0 0.0
    %1374 = vmatpush1.msra.mxu0 0.0
    %1375 = vmatprep.subr.mxu0 0.0
    %1376 = vmatpush1.msra.mxu0 0.0
    %1377 = vmatprep.subr.mxu0 0.0
    %1378 = vmatpush1.msra.mxu0 0.0
    %1379 = vmatprep.subr.mxu0 0.0
    %1380 = vmatpush1.msra.mxu0 0.0
    %1381 = vmatprep.mubr.f32.mxu0 0.0
    %1382 = vmatmul.mubr.f32.gmra.mrb[0].mxu0 %v1311
    %v1383 = vpop.f32.mrb[0].mxu0
    %v1384 = vadd.f32 %v1313, %v1383
    %v1385 = vpop.f32.mrb[0].mxu0
    %v1386 = vadd.f32 %v1314, %v1385
    %1387 = vdwg.mxu0
    %1388 = vmatprep.subr.mxu0 %v395
    %1389 = vmatpush1.msra.mxu0 %v394
    %1390 = vmatprep.subr.mxu0 %v399
    %1391 = vmatpush1.msra.mxu0 %v398
    %1392 = vmatprep.subr.mxu0 %v403
    %1393 = vmatpush1.msra.mxu0 %v402
    %1394 = vmatprep.subr.mxu0 %v407
    %1395 = vmatpush1.msra.mxu0 %v406
    %1396 = vmatprep.subr.mxu0 %v411
    %1397 = vmatpush1.msra.mxu0 %v410
    %1398 = vmatprep.subr.mxu0 %v415
    %1399 = vmatpush1.msra.mxu0 %v414
    %1400 = vmatprep.subr.mxu0 %v419
    %1401 = vmatpush1.msra.mxu0 %v418
    %1402 = vmatprep.subr.mxu0 %v423
    %1403 = vmatpush1.msra.mxu0 %v422
    %1404 = vmatprep.subr.mxu0 %v427
    %1405 = vmatpush1.msra.mxu0 %v426
    %1406 = vmatprep.subr.mxu0 %v431
    %1407 = vmatpush1.msra.mxu0 %v430
    %1408 = vmatprep.subr.mxu0 %v435
    %1409 = vmatpush1.msra.mxu0 %v434
    %1410 = vmatprep.subr.mxu0 %v439
    %1411 = vmatpush1.msra.mxu0 %v438
    %1412 = vmatprep.subr.mxu0 %v443
    %1413 = vmatpush1.msra.mxu0 %v442
    %1414 = vmatprep.subr.mxu0 %v447
    %1415 = vmatpush1.msra.mxu0 %v446
    %1416 = vmatprep.subr.mxu0 %v451
    %1417 = vmatpush1.msra.mxu0 %v450
    %1418 = vmatprep.subr.mxu0 %v455
    %1419 = vmatpush1.msra.mxu0 %v454
    %1420 = vmatprep.subr.mxu0 0.0
    %1421 = vmatpush1.msra.mxu0 0.0
    %1422 = vmatprep.subr.mxu0 0.0
    %1423 = vmatpush1.msra.mxu0 0.0
    %1424 = vmatprep.subr.mxu0 0.0
    %1425 = vmatpush1.msra.mxu0 0.0
    %1426 = vmatprep.subr.mxu0 0.0
    %1427 = vmatpush1.msra.mxu0 0.0
    %1428 = vmatprep.subr.mxu0 0.0
    %1429 = vmatpush1.msra.mxu0 0.0
    %1430 = vmatprep.subr.mxu0 0.0
    %1431 = vmatpush1.msra.mxu0 0.0
    %1432 = vmatprep.subr.mxu0 0.0
    %1433 = vmatpush1.msra.mxu0 0.0
    %1434 = vmatprep.subr.mxu0 0.0
    %1435 = vmatpush1.msra.mxu0 0.0
    %1436 = vmatprep.subr.mxu0 0.0
    %1437 = vmatpush1.msra.mxu0 0.0
    %1438 = vmatprep.subr.mxu0 0.0
    %1439 = vmatpush1.msra.mxu0 0.0
    %1440 = vmatprep.subr.mxu0 0.0
    %1441 = vmatpush1.msra.mxu0 0.0
    %1442 = vmatprep.subr.mxu0 0.0
    %1443 = vmatpush1.msra.mxu0 0.0
    %1444 = vmatprep.subr.mxu0 0.0
    %1445 = vmatpush1.msra.mxu0 0.0
    %1446 = vmatprep.subr.mxu0 0.0
    %1447 = vmatpush1.msra.mxu0 0.0
    %1448 = vmatprep.subr.mxu0 0.0
    %1449 = vmatpush1.msra.mxu0 0.0
    %1450 = vmatprep.subr.mxu0 0.0
    %1451 = vmatpush1.msra.mxu0 0.0
    %1452 = vmatprep.mubr.f32.mxu0 0.0
    %1453 = vmatmul.mubr.f32.gmra.mrb[0].mxu0 %v1311
    %v1454 = vpop.f32.mrb[0].mxu0
    %v1455 = vadd.f32 %v1315, %v1454
    %v1456 = vpop.f32.mrb[0].mxu0
    %v1457 = vadd.f32 %v1316, %v1456
    %1458 = vdwg.mxu0
    %v1459 = vxor.u32 %v1384, 2147483648
    %v1460 = vmul.f32 %v1459, 1.442695
    %v1461 = vpow.pop %v1460
    %v1462 = vadd.f32 %v1461, 1.0
    %v1463 = vrcp.pop %v1462
    %v1464 = vmul.f32 1.0, %v1463
    %v1465 = vxor.u32 %v1386, 2147483648
    %v1466 = vmul.f32 %v1465, 1.442695
    %v1467 = vpow.pop %v1466
    %v1468 = vadd.f32 %v1467, 1.0
    %v1469 = vrcp.pop %v1468
    %v1470 = vmul.f32 1.0, %v1469
    %v1471 = vtanh.pop %v1455
    %v1472 = vxor.u32 %v1457, 2147483648
    %v1473 = vmul.f32 %v1472, 1.442695
    %v1474 = vpow.pop %v1473
    %v1475 = vadd.f32 %v1474, 1.0
    %v1476 = vrcp.pop %v1475
    %v1477 = vmul.f32 1.0, %v1476
    %v1478 = vmul.f32 %v1470, %v1309
    %v1479 = vmul.f32 %v1464, %v1471
    %v1480 = vadd.f32 %v1478, %v1479
    %v1481 = vtanh.pop %v1480
    %v1482 = vmul.f32 %v1477, %v1481
    %s1483 = scalar_lea.vmem [#allocation4], 192
    %v1484 = vld [vmem:[%s1483] sm:$0xff]
    %v1485 = vld [vmem:[%s1483 + $0x8] sm:$0xff]
    %v1486 = vld [vmem:[%s1483 + $0x10] sm:$0xff]
    %v1487 = vld [vmem:[%s1483 + $0x18] sm:$0xff]
    %1488 = vmatprep.subr.mxu0 %v393
    %1489 = vmatpush1.msra.mxu0 %v392
    %1490 = vmatprep.subr.mxu0 %v397
    %1491 = vmatpush1.msra.mxu0 %v396
    %1492 = vmatprep.subr.mxu0 %v401
    %1493 = vmatpush1.msra.mxu0 %v400
    %1494 = vmatprep.subr.mxu0 %v405
    %1495 = vmatpush1.msra.mxu0 %v404
    %1496 = vmatprep.subr.mxu0 %v409
    %1497 = vmatpush1.msra.mxu0 %v408
    %1498 = vmatprep.subr.mxu0 %v413
    %1499 = vmatpush1.msra.mxu0 %v412
    %1500 = vmatprep.subr.mxu0 %v417
    %1501 = vmatpush1.msra.mxu0 %v416
    %1502 = vmatprep.subr.mxu0 %v421
    %1503 = vmatpush1.msra.mxu0 %v420
    %1504 = vmatprep.subr.mxu0 %v425
    %1505 = vmatpush1.msra.mxu0 %v424
    %1506 = vmatprep.subr.mxu0 %v429
    %1507 = vmatpush1.msra.mxu0 %v428
    %1508 = vmatprep.subr.mxu0 %v433
    %1509 = vmatpush1.msra.mxu0 %v432
    %1510 = vmatprep.subr.mxu0 %v437
    %1511 = vmatpush1.msra.mxu0 %v436
    %1512 = vmatprep.subr.mxu0 %v441
    %1513 = vmatpush1.msra.mxu0 %v440
    %1514 = vmatprep.subr.mxu0 %v445
    %1515 = vmatpush1.msra.mxu0 %v444
    %1516 = vmatprep.subr.mxu0 %v449
    %1517 = vmatpush1.msra.mxu0 %v448
    %1518 = vmatprep.subr.mxu0 %v453
    %1519 = vmatpush1.msra.mxu0 %v452
    %1520 = vmatprep.subr.mxu0 0.0
    %1521 = vmatpush1.msra.mxu0 0.0
    %1522 = vmatprep.subr.mxu0 0.0
    %1523 = vmatpush1.msra.mxu0 0.0
    %1524 = vmatprep.subr.mxu0 0.0
    %1525 = vmatpush1.msra.mxu0 0.0
    %1526 = vmatprep.subr.mxu0 0.0
    %1527 = vmatpush1.msra.mxu0 0.0
    %1528 = vmatprep.subr.mxu0 0.0
    %1529 = vmatpush1.msra.mxu0 0.0
    %1530 = vmatprep.subr.mxu0 0.0
    %1531 = vmatpush1.msra.mxu0 0.0
    %1532 = vmatprep.subr.mxu0 0.0
    %1533 = vmatpush1.msra.mxu0 0.0
    %1534 = vmatprep.subr.mxu0 0.0
    %1535 = vmatpush1.msra.mxu0 0.0
    %1536 = vmatprep.subr.mxu0 0.0
    %1537 = vmatpush1.msra.mxu0 0.0
    %1538 = vmatprep.subr.mxu0 0.0
    %1539 = vmatpush1.msra.mxu0 0.0
    %1540 = vmatprep.subr.mxu0 0.0
    %1541 = vmatpush1.msra.mxu0 0.0
    %1542 = vmatprep.subr.mxu0 0.0
    %1543 = vmatpush1.msra.mxu0 0.0
    %1544 = vmatprep.subr.mxu0 0.0
    %1545 = vmatpush1.msra.mxu0 0.0
    %1546 = vmatprep.subr.mxu0 0.0
    %1547 = vmatpush1.msra.mxu0 0.0
    %1548 = vmatprep.subr.mxu0 0.0
    %1549 = vmatpush1.msra.mxu0 0.0
    %1550 = vmatprep.subr.mxu0 0.0
    %1551 = vmatpush1.msra.mxu0 0.0
    %1552 = vmatprep.mubr.f32.mxu0 0.0
    %1553 = vmatmul.mubr.f32.gmra.mrb[0].mxu0 %v1482
    %v1554 = vpop.f32.mrb[0].mxu0
    %v1555 = vadd.f32 %v1484, %v1554
    %v1556 = vpop.f32.mrb[0].mxu0
    %v1557 = vadd.f32 %v1485, %v1556
    %1558 = vdwg.mxu0
    %1559 = vmatprep.subr.mxu0 %v395
    %1560 = vmatpush1.msra.mxu0 %v394
    %1561 = vmatprep.subr.mxu0 %v399
    %1562 = vmatpush1.msra.mxu0 %v398
    %1563 = vmatprep.subr.mxu0 %v403
    %1564 = vmatpush1.msra.mxu0 %v402
    %1565 = vmatprep.subr.mxu0 %v407
    %1566 = vmatpush1.msra.mxu0 %v406
    %1567 = vmatprep.subr.mxu0 %v411
    %1568 = vmatpush1.msra.mxu0 %v410
    %1569 = vmatprep.subr.mxu0 %v415
    %1570 = vmatpush1.msra.mxu0 %v414
    %1571 = vmatprep.subr.mxu0 %v419
    %1572 = vmatpush1.msra.mxu0 %v418
    %1573 = vmatprep.subr.mxu0 %v423
    %1574 = vmatpush1.msra.mxu0 %v422
    %1575 = vmatprep.subr.mxu0 %v427
    %1576 = vmatpush1.msra.mxu0 %v426
    %1577 = vmatprep.subr.mxu0 %v431
    %1578 = vmatpush1.msra.mxu0 %v430
    %1579 = vmatprep.subr.mxu0 %v435
    %1580 = vmatpush1.msra.mxu0 %v434
    %1581 = vmatprep.subr.mxu0 %v439
    %1582 = vmatpush1.msra.mxu0 %v438
    %1583 = vmatprep.subr.mxu0 %v443
    %1584 = vmatpush1.msra.mxu0 %v442
    %1585 = vmatprep.subr.mxu0 %v447
    %1586 = vmatpush1.msra.mxu0 %v446
    %1587 = vmatprep.subr.mxu0 %v451
    %1588 = vmatpush1.msra.mxu0 %v450
    %1589 = vmatprep.subr.mxu0 %v455
    %1590 = vmatpush1.msra.mxu0 %v454
    %1591 = vmatprep.subr.mxu0 0.0
    %1592 = vmatpush1.msra.mxu0 0.0
    %1593 = vmatprep.subr.mxu0 0.0
    %1594 = vmatpush1.msra.mxu0 0.0
    %1595 = vmatprep.subr.mxu0 0.0
    %1596 = vmatpush1.msra.mxu0 0.0
    %1597 = vmatprep.subr.mxu0 0.0
    %1598 = vmatpush1.msra.mxu0 0.0
    %1599 = vmatprep.subr.mxu0 0.0
    %1600 = vmatpush1.msra.mxu0 0.0
    %1601 = vmatprep.subr.mxu0 0.0
    %1602 = vmatpush1.msra.mxu0 0.0
    %1603 = vmatprep.subr.mxu0 0.0
    %1604 = vmatpush1.msra.mxu0 0.0
    %1605 = vmatprep.subr.mxu0 0.0
    %1606 = vmatpush1.msra.mxu0 0.0
    %1607 = vmatprep.subr.mxu0 0.0
    %1608 = vmatpush1.msra.mxu0 0.0
    %1609 = vmatprep.subr.mxu0 0.0
    %1610 = vmatpush1.msra.mxu0 0.0
    %1611 = vmatprep.subr.mxu0 0.0
    %1612 = vmatpush1.msra.mxu0 0.0
    %1613 = vmatprep.subr.mxu0 0.0
    %1614 = vmatpush1.msra.mxu0 0.0
    %1615 = vmatprep.subr.mxu0 0.0
    %1616 = vmatpush1.msra.mxu0 0.0
    %1617 = vmatprep.subr.mxu0 0.0
    %1618 = vmatpush1.msra.mxu0 0.0
    %1619 = vmatprep.subr.mxu0 0.0
    %1620 = vmatpush1.msra.mxu0 0.0
    %1621 = vmatprep.subr.mxu0 0.0
    %1622 = vmatpush1.msra.mxu0 0.0
    %1623 = vmatprep.mubr.f32.mxu0 0.0
    %1624 = vmatmul.mubr.f32.gmra.mrb[0].mxu0 %v1482
    %v1625 = vpop.f32.mrb[0].mxu0
    %v1626 = vadd.f32 %v1486, %v1625
    %v1627 = vpop.f32.mrb[0].mxu0
    %v1628 = vadd.f32 %v1487, %v1627
    %1629 = vdwg.mxu0
    %v1630 = vxor.u32 %v1555, 2147483648
    %v1631 = vmul.f32 %v1630, 1.442695
    %v1632 = vpow.pop %v1631
    %v1633 = vadd.f32 %v1632, 1.0
    %v1634 = vrcp.pop %v1633
    %v1635 = vmul.f32 1.0, %v1634
    %v1636 = vxor.u32 %v1557, 2147483648
    %v1637 = vmul.f32 %v1636, 1.442695
    %v1638 = vpow.pop %v1637
    %v1639 = vadd.f32 %v1638, 1.0
    %v1640 = vrcp.pop %v1639
    %v1641 = vmul.f32 1.0, %v1640
    %v1642 = vtanh.pop %v1626
    %v1643 = vxor.u32 %v1628, 2147483648
    %v1644 = vmul.f32 %v1643, 1.442695
    %v1645 = vpow.pop %v1644
    %v1646 = vadd.f32 %v1645, 1.0
    %v1647 = vrcp.pop %v1646
    %v1648 = vmul.f32 1.0, %v1647
    %v1649 = vmul.f32 %v1641, %v1480
    %v1650 = vmul.f32 %v1635, %v1642
    %v1651 = vadd.f32 %v1649, %v1650
    %v1652 = vtanh.pop %v1651
    %v1653 = vmul.f32 %v1648, %v1652
    %s1654 = scalar_lea.vmem [#allocation4], 224
    %v1655 = vld [vmem:[%s1654] sm:$0xff]
    %v1656 = vld [vmem:[%s1654 + $0x8] sm:$0xff]
    %v1657 = vld [vmem:[%s1654 + $0x10] sm:$0xff]
    %v1658 = vld [vmem:[%s1654 + $0x18] sm:$0xff]
    %1659 = vmatprep.subr.mxu0 %v393
    %1660 = vmatpush1.msra.mxu0 %v392
    %1661 = vmatprep.subr.mxu0 %v397
    %1662 = vmatpush1.msra.mxu0 %v396
    %1663 = vmatprep.subr.mxu0 %v401
    %1664 = vmatpush1.msra.mxu0 %v400
    %1665 = vmatprep.subr.mxu0 %v405
    %1666 = vmatpush1.msra.mxu0 %v404
    %1667 = vmatprep.subr.mxu0 %v409
    %1668 = vmatpush1.msra.mxu0 %v408
    %1669 = vmatprep.subr.mxu0 %v413
    %1670 = vmatpush1.msra.mxu0 %v412
    %1671 = vmatprep.subr.mxu0 %v417
    %1672 = vmatpush1.msra.mxu0 %v416
    %1673 = vmatprep.subr.mxu0 %v421
    %1674 = vmatpush1.msra.mxu0 %v420
    %1675 = vmatprep.subr.mxu0 %v425
    %1676 = vmatpush1.msra.mxu0 %v424
    %1677 = vmatprep.subr.mxu0 %v429
    %1678 = vmatpush1.msra.mxu0 %v428
    %1679 = vmatprep.subr.mxu0 %v433
    %1680 = vmatpush1.msra.mxu0 %v432
    %1681 = vmatprep.subr.mxu0 %v437
    %1682 = vmatpush1.msra.mxu0 %v436
    %1683 = vmatprep.subr.mxu0 %v441
    %1684 = vmatpush1.msra.mxu0 %v440
    %1685 = vmatprep.subr.mxu0 %v445
    %1686 = vmatpush1.msra.mxu0 %v444
    %1687 = vmatprep.subr.mxu0 %v449
    %1688 = vmatpush1.msra.mxu0 %v448
    %1689 = vmatprep.subr.mxu0 %v453
    %1690 = vmatpush1.msra.mxu0 %v452
    %1691 = vmatprep.subr.mxu0 0.0
    %1692 = vmatpush1.msra.mxu0 0.0
    %1693 = vmatprep.subr.mxu0 0.0
    %1694 = vmatpush1.msra.mxu0 0.0
    %1695 = vmatprep.subr.mxu0 0.0
    %1696 = vmatpush1.msra.mxu0 0.0
    %1697 = vmatprep.subr.mxu0 0.0
    %1698 = vmatpush1.msra.mxu0 0.0
    %1699 = vmatprep.subr.mxu0 0.0
    %1700 = vmatpush1.msra.mxu0 0.0
    %1701 = vmatprep.subr.mxu0 0.0
    %1702 = vmatpush1.msra.mxu0 0.0
    %1703 = vmatprep.subr.mxu0 0.0
    %1704 = vmatpush1.msra.mxu0 0.0
    %1705 = vmatprep.subr.mxu0 0.0
    %1706 = vmatpush1.msra.mxu0 0.0
    %1707 = vmatprep.subr.mxu0 0.0
    %1708 = vmatpush1.msra.mxu0 0.0
    %1709 = vmatprep.subr.mxu0 0.0
    %1710 = vmatpush1.msra.mxu0 0.0
    %1711 = vmatprep.subr.mxu0 0.0
    %1712 = vmatpush1.msra.mxu0 0.0
    %1713 = vmatprep.subr.mxu0 0.0
    %1714 = vmatpush1.msra.mxu0 0.0
    %1715 = vmatprep.subr.mxu0 0.0
    %1716 = vmatpush1.msra.mxu0 0.0
    %1717 = vmatprep.subr.mxu0 0.0
    %1718 = vmatpush1.msra.mxu0 0.0
    %1719 = vmatprep.subr.mxu0 0.0
    %1720 = vmatpush1.msra.mxu0 0.0
    %1721 = vmatprep.subr.mxu0 0.0
    %1722 = vmatpush1.msra.mxu0 0.0
    %1723 = vmatprep.mubr.f32.mxu0 0.0
    %1724 = vmatmul.mubr.f32.gmra.mrb[0].mxu0 %v1653
    %v1725 = vpop.f32.mrb[0].mxu0
    %v1726 = vadd.f32 %v1655, %v1725
    %v1727 = vpop.f32.mrb[0].mxu0
    %v1728 = vadd.f32 %v1656, %v1727
    %1729 = vdwg.mxu0
    %1730 = vmatprep.subr.mxu0 %v395
    %1731 = vmatpush1.msra.mxu0 %v394
    %1732 = vmatprep.subr.mxu0 %v399
    %1733 = vmatpush1.msra.mxu0 %v398
    %1734 = vmatprep.subr.mxu0 %v403
    %1735 = vmatpush1.msra.mxu0 %v402
    %1736 = vmatprep.subr.mxu0 %v407
    %1737 = vmatpush1.msra.mxu0 %v406
    %1738 = vmatprep.subr.mxu0 %v411
    %1739 = vmatpush1.msra.mxu0 %v410
    %1740 = vmatprep.subr.mxu0 %v415
    %1741 = vmatpush1.msra.mxu0 %v414
    %1742 = vmatprep.subr.mxu0 %v419
    %1743 = vmatpush1.msra.mxu0 %v418
    %1744 = vmatprep.subr.mxu0 %v423
    %1745 = vmatpush1.msra.mxu0 %v422
    %1746 = vmatprep.subr.mxu0 %v427
    %1747 = vmatpush1.msra.mxu0 %v426
    %1748 = vmatprep.subr.mxu0 %v431
    %1749 = vmatpush1.msra.mxu0 %v430
    %1750 = vmatprep.subr.mxu0 %v435
    %1751 = vmatpush1.msra.mxu0 %v434
    %1752 = vmatprep.subr.mxu0 %v439
    %1753 = vmatpush1.msra.mxu0 %v438
    %1754 = vmatprep.subr.mxu0 %v443
    %1755 = vmatpush1.msra.mxu0 %v442
    %1756 = vmatprep.subr.mxu0 %v447
    %1757 = vmatpush1.msra.mxu0 %v446
    %1758 = vmatprep.subr.mxu0 %v451
    %1759 = vmatpush1.msra.mxu0 %v450
    %1760 = vmatprep.subr.mxu0 %v455
    %1761 = vmatpush1.msra.mxu0 %v454
    %1762 = vmatprep.subr.mxu0 0.0
    %1763 = vmatpush1.msra.mxu0 0.0
    %1764 = vmatprep.subr.mxu0 0.0
    %1765 = vmatpush1.msra.mxu0 0.0
    %1766 = vmatprep.subr.mxu0 0.0
    %1767 = vmatpush1.msra.mxu0 0.0
    %1768 = vmatprep.subr.mxu0 0.0
    %1769 = vmatpush1.msra.mxu0 0.0
    %1770 = vmatprep.subr.mxu0 0.0
    %1771 = vmatpush1.msra.mxu0 0.0
    %1772 = vmatprep.subr.mxu0 0.0
    %1773 = vmatpush1.msra.mxu0 0.0
    %1774 = vmatprep.subr.mxu0 0.0
    %1775 = vmatpush1.msra.mxu0 0.0
    %1776 = vmatprep.subr.mxu0 0.0
    %1777 = vmatpush1.msra.mxu0 0.0
    %1778 = vmatprep.subr.mxu0 0.0
    %1779 = vmatpush1.msra.mxu0 0.0
    %1780 = vmatprep.subr.mxu0 0.0
    %1781 = vmatpush1.msra.mxu0 0.0
    %1782 = vmatprep.subr.mxu0 0.0
    %1783 = vmatpush1.msra.mxu0 0.0
    %1784 = vmatprep.subr.mxu0 0.0
    %1785 = vmatpush1.msra.mxu0 0.0
    %1786 = vmatprep.subr.mxu0 0.0
    %1787 = vmatpush1.msra.mxu0 0.0
    %1788 = vmatprep.subr.mxu0 0.0
    %1789 = vmatpush1.msra.mxu0 0.0
    %1790 = vmatprep.subr.mxu0 0.0
    %1791 = vmatpush1.msra.mxu0 0.0
    %1792 = vmatprep.subr.mxu0 0.0
    %1793 = vmatpush1.msra.mxu0 0.0
    %1794 = vmatprep.mubr.f32.mxu0 0.0
    %1795 = vmatmul.mubr.f32.gmra.mrb[0].mxu0 %v1653
    %v1796 = vpop.f32.mrb[0].mxu0
    %v1797 = vadd.f32 %v1657, %v1796
    %v1798 = vpop.f32.mrb[0].mxu0
    %v1799 = vadd.f32 %v1658, %v1798
    %1800 = vdwg.mxu0
    %v1801 = vxor.u32 %v1726, 2147483648
    %v1802 = vmul.f32 %v1801, 1.442695
    %v1803 = vpow.pop %v1802
    %v1804 = vadd.f32 %v1803, 1.0
    %v1805 = vrcp.pop %v1804
    %v1806 = vmul.f32 1.0, %v1805
    %v1807 = vxor.u32 %v1728, 2147483648
    %v1808 = vmul.f32 %v1807, 1.442695
    %v1809 = vpow.pop %v1808
    %v1810 = vadd.f32 %v1809, 1.0
    %v1811 = vrcp.pop %v1810
    %v1812 = vmul.f32 1.0, %v1811
    %v1813 = vtanh.pop %v1797
    %v1814 = vxor.u32 %v1799, 2147483648
    %v1815 = vmul.f32 %v1814, 1.442695
    %v1816 = vpow.pop %v1815
    %v1817 = vadd.f32 %v1816, 1.0
    %v1818 = vrcp.pop %v1817
    %v1819 = vmul.f32 1.0, %v1818
    %v1820 = vmul.f32 %v1812, %v1651
    %v1821 = vmul.f32 %v1806, %v1813
    %v1822 = vadd.f32 %v1820, %v1821
    %v1823 = vtanh.pop %v1822
    %v1824 = vmul.f32 %v1819, %v1823
    %1825 = vst [vmem:[#allocation2] sm:$0xff] %v1824
    %1826 = vst [vmem:[#allocation3] sm:$0xff] %v1822
    // Predicated region
    $region38: #{lstm_encoder_forward.1} parent=1 // pred_check
      %p1827 = pneg %p69
    $region39: #{lstm_encoder_forward.1} parent=1 // pred_check_branch
      %1829 = sbr.rel (%p1827) target = $region41
    $region40: #{lstm_encoder_forward.1} parent=1 // pred_region
      %1830 = vst [vmem:[#allocation13] sm:$0xff] %v1824
    $region41: #{lstm_encoder_forward.1} parent=1 // pred_fallthru
      _
    // Predicated region
    $region42: #{lstm_encoder_forward.1} parent=1 // pred_check
      _
    $region43: #{lstm_encoder_forward.1} parent=1 // pred_check_branch
      %1832 = sbr.rel (0) target = $region45
    $region44: #{lstm_encoder_forward.1} parent=1 // pred_region
      %s1834 = ssub.s32 128, 128
      %1835 = vsyncadd [#allocation7], %s1834
      %s1837 = sshll.u32 [#allocation13], 4
      %s1838 = int_to_ptr.vmem [resolvable:$true] %s1837
      %1840 = dma.vmem_to_hbm [thread:$0]  %s1838, 128, %s4, [#allocation7]
    $region45: #{lstm_encoder_forward.1} parent=1 // pred_fallthru
      _
    // Predicated region
    $region46: #{lstm_encoder_forward.1} parent=1 // pred_check
      _
    $region47: #{lstm_encoder_forward.1} parent=1 // pred_check_branch
      %1842 = sbr.rel (0) target = $region49
    $region48: #{lstm_encoder_forward.1} parent=1 // pred_region
      %1843 = dma.done [#allocation7], 128
    $region49: #{lstm_encoder_forward.1} parent=1 // pred_fallthru
      _
    %1844 = vsyncpa [#allocation6], 1
    %1845 = vsyncpa [#allocation9], 1
    %1846 = vsyncpa [#allocation12], 1
    %1847 = vsyncpa [#allocation7], 1

</llo_original>
